<compile_context>
chip_gen: v7x
topology: tpu7x:2x2x1
jax: 0.10.0
libtpu: 0.0.40
codegen_flags: <defaults>
</compile_context>

<pallas_src>
import numpy as np
import jax
import jax.numpy as jnp
from jax.experimental import pallas as pl
from jax.experimental.pallas import tpu as pltpu


def _pick_batch_tile(n, oh, ow, target_m=512):
    """Largest divisor of n whose flattened matmul M dim stays <= target."""
    bt = 1
    for d in range(1, n + 1):
        if n % d == 0 and d * oh * ow <= max(oh * ow, target_m):
            bt = d
    return bt


def _make_kernel(B, HP, OH, OW, PH, PW, C1, CT, SH, SW, L):
    M = B * OH * OW

    def kernel(x_ref, w_ref, b_ref, o_ref, pad_ref):
        # x_ref:   (B, HP, WP, C1)   zero-padded NHWC input tile (HP even)
        # w_ref:   (9, C1, CT)       conv weights (BN scale folded), one 128-lane chunk
        # b_ref:   (1, CT)           BN bias chunk
        # o_ref:   (B, PH, PW, CT)   pooled output block
        # pad_ref: (B, SH, SW, CT)   zero-bordered conv+BN+ReLU scratch

        # ---- Conv2d(3x3, s=2, p=1): 9 accumulated MXU matmuls (no HBM im2col) ----
        acc = None
        for kw in range(3):
            col = x_ref[:, :, pl.ds(kw, OW, 2), :]              # (B, HP, OW, C1)
            col = col.reshape(B, HP // 2, 2, OW, C1)            # free: leading-dim split
            taps = (col[:, 0:OH, 0],                            # kh = 0  (rows 2*oh)
                    col[:, 0:OH, 1],                            # kh = 1  (rows 2*oh+1)
                    col[:, 1:OH + 1, 0])                        # kh = 2  (rows 2*oh+2)
            for kh in range(3):
                lhs = taps[kh].reshape(M, C1)
                part = jnp.dot(lhs, w_ref[kh * 3 + kw],
                               preferred_element_type=jnp.float32)
                acc = part if acc is None else acc + part

        # ---- BatchNorm bias (scale already folded into weights) + ReLU (VPU) ----
        y = jnp.maximum(acc + b_ref[...], 0.0).reshape(B, OH, OW, CT)

        # ---- stash conv output: zero ONLY the borders, interior store is
        #      sublane-aligned at column offset L=8 ----
        pad_ref[:, 0:1, :, :] = jnp.zeros((B, 1, SW, CT), jnp.float32)
        pad_ref[:, OH + 1:SH, :, :] = jnp.zeros((B, SH - OH - 1, SW, CT), jnp.float32)
        pad_ref[:, :, 0:L, :] = jnp.zeros((B, SH, L, CT), jnp.float32)
        if L + OW < SW:  # right zero column only needed when OW is odd
            pad_ref[:, :, L + OW:SW, :] = jnp.zeros((B, SH, SW - (L + OW), CT), jnp.float32)
        pad_ref[:, 1:OH + 1, L:L + OW, :] = y

        # ---- MaxPool2d(3, s=2, p=1) ----
        # W-reduction: 3 sublane-strided ref reads (zero pad is exact post-ReLU).
        q0 = pad_ref[:, :, pl.ds(L - 1, PW, 2), :]
        q1 = pad_ref[:, :, pl.ds(L, PW, 2), :]
        q2 = pad_ref[:, :, pl.ds(L + 1, PW, 2), :]
        wmax = jnp.maximum(jnp.maximum(q0, q1), q2)             # (B, SH, PW, CT)
        # H-reduction: free parity reshape on the (leading) row dim, no scratch.
        wmax = wmax.reshape(B, SH // 2, 2, PW, CT)
        ev = wmax[:, :, 0]                                      # rows 0,2,...,SH-2
        od = wmax[:, :, 1]                                      # rows 1,3,...,SH-1
        pooled = jnp.maximum(jnp.maximum(ev[:, 0:PH], od[:, 0:PH]), ev[:, 1:PH + 1])
        o_ref[...] = pooled.astype(o_ref.dtype)

    return kernel


def conv_maxpool_forward(x_nchw, w_oihw, bn_scale, bn_bias):
    """x: (N, C1, H, W) f32; w: (C2, C1, 3, 3); bn_scale/bn_bias: (C2,).
    Returns (N, C2, PH, PW) f32 (same as the PyTorch module's forward)."""
    N, C1, H, W = x_nchw.shape
    C2 = w_oihw.shape[0]
    OH = (H - 1) // 2 + 1
    OW = (W - 1) // 2 + 1
    PH = (OH - 1) // 2 + 1
    PW = (OW - 1) // 2 + 1
    CT = 128                                  # lane chunk of output channels
    C2P = ((C2 + CT - 1) // CT) * CT
    HP = 2 * OH + 2                           # even padded row count (>= H + 2)
    WP = W + 2
    L = 8                                     # sublane-aligned left pad in the scratch
    SH = 2 * PH + 2
    SW = L + OW + (1 if OW % 2 else 0)
    BT = _pick_batch_tile(N, OH, OW)

    # --- glue: NCHW -> NHWC, spatial zero pad (input-sized data movement only) ---
    x_nhwc = jnp.transpose(x_nchw, (0, 2, 3, 1))
    x_pad = jnp.pad(x_nhwc, ((0, 0), (1, HP - 1 - H), (1, 1), (0, 0)))

    # weights (C2,C1,3,3) -> (kh,kw,C1,C2) -> (9,C1,C2); fold BN scale; lane-pad C2.
    w_k = jnp.transpose(w_oihw, (2, 3, 1, 0)).reshape(9, C1, C2) * bn_scale[None, None, :]
    w_k = jnp.pad(w_k, ((0, 0), (0, 0), (0, C2P - C2)))
    bias = jnp.pad(bn_bias, (0, C2P - C2)).reshape(1, C2P)

    grid = (N // BT, C2P // CT)               # (batch tiles, channel chunks) - both parallel

    cost = pl.CostEstimate(
        flops=2 * N * OH * OW * 9 * C1 * C2P,
        transcendentals=0,
        bytes_accessed=4 * (N * HP * WP * C1 * (C2P // CT)
                            + 9 * C1 * C2P + C2P + N * PH * PW * C2P),
    )

    out4 = pl.pallas_call(
        _make_kernel(BT, HP, OH, OW, PH, PW, C1, CT, SH, SW, L),
        out_shape=jax.ShapeDtypeStruct((N, PH, PW, C2P), jnp.float32),
        grid_spec=pltpu.PrefetchScalarGridSpec(
            num_scalar_prefetch=0,
            grid=grid,
            in_specs=[
                pl.BlockSpec((BT, HP, WP, C1), lambda n, j: (n, 0, 0, 0)),
                pl.BlockSpec((9, C1, CT), lambda n, j: (0, 0, j)),
                pl.BlockSpec((1, CT), lambda n, j: (0, j)),
            ],
            out_specs=pl.BlockSpec((BT, PH, PW, CT), lambda n, j: (n, 0, 0, j)),
            scratch_shapes=[pltpu.VMEM((BT, SH, SW, CT), jnp.float32)],
        ),
        compiler_params=pltpu.CompilerParams(
            dimension_semantics=("parallel", "parallel")),
        cost_estimate=cost,
    )(x_pad, w_k, bias)

    # slice off lane padding, NHWC -> NCHW
    return jnp.transpose(out4[:, :, :, :C2], (0, 3, 1, 2))


def _reference(x_nchw, w_oihw, bn_scale, bn_bias):
    y = jax.lax.conv_general_dilated(
        x_nchw, w_oihw, window_strides=(2, 2), padding=((1, 1), (1, 1)),
        dimension_numbers=('NCHW', 'OIHW', 'NCHW'))
    y = y * bn_scale[None, :, None, None] + bn_bias[None, :, None, None]
    y = jnp.maximum(y, 0.0)
    y = jax.lax.reduce_window(
        y, -jnp.inf, jax.lax.max,
        window_dimensions=(1, 1, 3, 3), window_strides=(1, 1, 2, 2),
        padding=((0, 0), (0, 0), (1, 1), (1, 1)))
    return y


if __name__ == "__main__":
    N, C1, C2, H, W = 2, 4, 8, 16, 16

    key = jax.random.PRNGKey(0)
    kx, kw, kg, kb, km, kv = jax.random.split(key, 6)
    x = jax.random.normal(kx, (N, C1, H, W), jnp.float32)

    # Deterministic synthetic parameters (shapes from the module __init__).
    conv_w = 0.1 * jax.random.normal(kw, (C2, C1, 3, 3), jnp.float32)   # Conv2d weight, bias=False
    gamma = 1.0 + 0.1 * jax.random.normal(kg, (C2,), jnp.float32)        # BN weight
    beta = 0.1 * jax.random.normal(kb, (C2,), jnp.float32)               # BN bias
    running_mean = 0.05 * jax.random.normal(km, (C2,), jnp.float32)
    running_var = jnp.abs(jax.random.normal(kv, (C2,), jnp.float32)) + 0.5
    eps = 1e-5
    bn_scale = gamma / jnp.sqrt(running_var + eps)
    bn_bias = beta - running_mean * bn_scale

    out = conv_maxpool_forward(x, conv_w, bn_scale, bn_bias)
    out = jax.block_until_ready(out)

    ref = jax.block_until_ready(_reference(x, conv_w, bn_scale, bn_bias))
    assert out.shape == ref.shape == (N, C2, 4, 4), (out.shape, ref.shape)
    np.testing.assert_allclose(np.asarray(out), np.asarray(ref), rtol=1e-4, atol=1e-4)

    print("KERNEL_OK")
</pallas_src>

<mosaic_0001>
module attributes {stable_mosaic.version = 11 : i64} {
  func.func @kernel(%arg0: i32, %arg1: i32, %arg2: memref<2x18x18x4xf32, #tpu.memory_space<vmem>>, %arg3: memref<9x4x128xf32, #tpu.memory_space<vmem>>, %arg4: memref<1x128xf32, #tpu.memory_space<vmem>>, %arg5: memref<2x4x4x128xf32, #tpu.memory_space<vmem>>, %arg6: memref<2x10x16x128xf32, #tpu.memory_space<vmem>>) attributes {dimension_semantics = [#tpu.dimension_semantics<parallel>, #tpu.dimension_semantics<parallel>], iteration_bounds = array<i64: 1, 1>, scalar_prefetch = 0 : i64, scratch_operands = 1 : i64, tpu.core_type = #tpu.core_type<tc>, window_params = [{transform_indices = @transform_0, window_bounds = array<i64: 2, 18, 18, 4>}, {transform_indices = @transform_1, window_bounds = array<i64: 9, 4, 128>}, {transform_indices = @transform_2, window_bounds = array<i64: 1, 128>}, {transform_indices = @transform_3, window_bounds = array<i64: 2, 4, 4, 128>}]} {
    %c0 = arith.constant 0 : index
    %c0_0 = arith.constant 0 : index
    %c0_1 = arith.constant 0 : index
    %c0_2 = arith.constant 0 : index
    %0 = tpu.strided_load %arg2[%c0, %c0_0, %c0_1, %c0_2] {strides = array<i32: 1, 1, 2, 1>} : memref<2x18x18x4xf32, #tpu.memory_space<vmem>>, vector<2x18x8x4xf32>
    %1 = vector.shape_cast %0 : vector<2x18x8x4xf32> to vector<2x9x2x8x4xf32>
    %2 = vector.extract_strided_slice %1 {offsets = [0, 0, 0, 0, 0], sizes = [2, 8, 1, 8, 4], strides = [1, 1, 1, 1, 1]} : vector<2x9x2x8x4xf32> to vector<2x8x1x8x4xf32>
    %3 = vector.shape_cast %2 : vector<2x8x1x8x4xf32> to vector<2x8x8x4xf32>
    %4 = vector.extract_strided_slice %1 {offsets = [0, 0, 1, 0, 0], sizes = [2, 8, 1, 8, 4], strides = [1, 1, 1, 1, 1]} : vector<2x9x2x8x4xf32> to vector<2x8x1x8x4xf32>
    %5 = vector.shape_cast %4 : vector<2x8x1x8x4xf32> to vector<2x8x8x4xf32>
    %6 = vector.extract_strided_slice %1 {offsets = [0, 1, 0, 0, 0], sizes = [2, 8, 1, 8, 4], strides = [1, 1, 1, 1, 1]} : vector<2x9x2x8x4xf32> to vector<2x8x1x8x4xf32>
    %7 = vector.shape_cast %6 : vector<2x8x1x8x4xf32> to vector<2x8x8x4xf32>
    %8 = vector.shape_cast %3 : vector<2x8x8x4xf32> to vector<128x4xf32>
    %c0_3 = arith.constant 0 : index
    %c0_4 = arith.constant 0 : index
    %c0_5 = arith.constant 0 : index
    %9 = vector.load %arg3[%c0_3, %c0_4, %c0_5] : memref<9x4x128xf32, #tpu.memory_space<vmem>>, vector<1x4x128xf32>
    %10 = vector.shape_cast %9 : vector<1x4x128xf32> to vector<4x128xf32>
    %cst = arith.constant dense<0.000000e+00> : vector<128x128xf32>
    %11 = tpu.matmul %8, %10, %cst {dimension_numbers = #tpu.dot_dimension_numbers<[1], [0], [0], [1], [0, 0, 1, 1], [], []>} : vector<128x4xf32>, vector<4x128xf32>, vector<128x128xf32> -> vector<128x128xf32>
    %12 = vector.shape_cast %5 : vector<2x8x8x4xf32> to vector<128x4xf32>
    %c3 = arith.constant 3 : index
    %c0_6 = arith.constant 0 : index
    %c0_7 = arith.constant 0 : index
    %13 = vector.load %arg3[%c3, %c0_6, %c0_7] : memref<9x4x128xf32, #tpu.memory_space<vmem>>, vector<1x4x128xf32>
    %14 = vector.shape_cast %13 : vector<1x4x128xf32> to vector<4x128xf32>
    %cst_8 = arith.constant dense<0.000000e+00> : vector<128x128xf32>
    %15 = tpu.matmul %12, %14, %cst_8 {dimension_numbers = #tpu.dot_dimension_numbers<[1], [0], [0], [1], [0, 0, 1, 1], [], []>} : vector<128x4xf32>, vector<4x128xf32>, vector<128x128xf32> -> vector<128x128xf32>
    %16 = arith.addf %11, %15 : vector<128x128xf32>
    %17 = vector.shape_cast %7 : vector<2x8x8x4xf32> to vector<128x4xf32>
    %c6 = arith.constant 6 : index
    %c0_9 = arith.constant 0 : index
    %c0_10 = arith.constant 0 : index
    %18 = vector.load %arg3[%c6, %c0_9, %c0_10] : memref<9x4x128xf32, #tpu.memory_space<vmem>>, vector<1x4x128xf32>
    %19 = vector.shape_cast %18 : vector<1x4x128xf32> to vector<4x128xf32>
    %cst_11 = arith.constant dense<0.000000e+00> : vector<128x128xf32>
    %20 = tpu.matmul %17, %19, %cst_11 {dimension_numbers = #tpu.dot_dimension_numbers<[1], [0], [0], [1], [0, 0, 1, 1], [], []>} : vector<128x4xf32>, vector<4x128xf32>, vector<128x128xf32> -> vector<128x128xf32>
    %21 = arith.addf %16, %20 : vector<128x128xf32>
    %c0_12 = arith.constant 0 : index
    %c0_13 = arith.constant 0 : index
    %c1 = arith.constant 1 : index
    %c0_14 = arith.constant 0 : index
    %22 = tpu.strided_load %arg2[%c0_12, %c0_13, %c1, %c0_14] {strides = array<i32: 1, 1, 2, 1>} : memref<2x18x18x4xf32, #tpu.memory_space<vmem>>, vector<2x18x8x4xf32>
    %23 = vector.shape_cast %22 : vector<2x18x8x4xf32> to vector<2x9x2x8x4xf32>
    %24 = vector.extract_strided_slice %23 {offsets = [0, 0, 0, 0, 0], sizes = [2, 8, 1, 8, 4], strides = [1, 1, 1, 1, 1]} : vector<2x9x2x8x4xf32> to vector<2x8x1x8x4xf32>
    %25 = vector.shape_cast %24 : vector<2x8x1x8x4xf32> to vector<2x8x8x4xf32>
    %26 = vector.extract_strided_slice %23 {offsets = [0, 0, 1, 0, 0], sizes = [2, 8, 1, 8, 4], strides = [1, 1, 1, 1, 1]} : vector<2x9x2x8x4xf32> to vector<2x8x1x8x4xf32>
    %27 = vector.shape_cast %26 : vector<2x8x1x8x4xf32> to vector<2x8x8x4xf32>
    %28 = vector.extract_strided_slice %23 {offsets = [0, 1, 0, 0, 0], sizes = [2, 8, 1, 8, 4], strides = [1, 1, 1, 1, 1]} : vector<2x9x2x8x4xf32> to vector<2x8x1x8x4xf32>
    %29 = vector.shape_cast %28 : vector<2x8x1x8x4xf32> to vector<2x8x8x4xf32>
    %30 = vector.shape_cast %25 : vector<2x8x8x4xf32> to vector<128x4xf32>
    %c1_15 = arith.constant 1 : index
    %c0_16 = arith.constant 0 : index
    %c0_17 = arith.constant 0 : index
    %31 = vector.load %arg3[%c1_15, %c0_16, %c0_17] : memref<9x4x128xf32, #tpu.memory_space<vmem>>, vector<1x4x128xf32>
    %32 = vector.shape_cast %31 : vector<1x4x128xf32> to vector<4x128xf32>
    %cst_18 = arith.constant dense<0.000000e+00> : vector<128x128xf32>
    %33 = tpu.matmul %30, %32, %cst_18 {dimension_numbers = #tpu.dot_dimension_numbers<[1], [0], [0], [1], [0, 0, 1, 1], [], []>} : vector<128x4xf32>, vector<4x128xf32>, vector<128x128xf32> -> vector<128x128xf32>
    %34 = arith.addf %21, %33 : vector<128x128xf32>
    %35 = vector.shape_cast %27 : vector<2x8x8x4xf32> to vector<128x4xf32>
    %c4 = arith.constant 4 : index
    %c0_19 = arith.constant 0 : index
    %c0_20 = arith.constant 0 : index
    %36 = vector.load %arg3[%c4, %c0_19, %c0_20] : memref<9x4x128xf32, #tpu.memory_space<vmem>>, vector<1x4x128xf32>
    %37 = vector.shape_cast %36 : vector<1x4x128xf32> to vector<4x128xf32>
    %cst_21 = arith.constant dense<0.000000e+00> : vector<128x128xf32>
    %38 = tpu.matmul %35, %37, %cst_21 {dimension_numbers = #tpu.dot_dimension_numbers<[1], [0], [0], [1], [0, 0, 1, 1], [], []>} : vector<128x4xf32>, vector<4x128xf32>, vector<128x128xf32> -> vector<128x128xf32>
    %39 = arith.addf %34, %38 : vector<128x128xf32>
    %40 = vector.shape_cast %29 : vector<2x8x8x4xf32> to vector<128x4xf32>
    %c7 = arith.constant 7 : index
    %c0_22 = arith.constant 0 : index
    %c0_23 = arith.constant 0 : index
    %41 = vector.load %arg3[%c7, %c0_22, %c0_23] : memref<9x4x128xf32, #tpu.memory_space<vmem>>, vector<1x4x128xf32>
    %42 = vector.shape_cast %41 : vector<1x4x128xf32> to vector<4x128xf32>
    %cst_24 = arith.constant dense<0.000000e+00> : vector<128x128xf32>
    %43 = tpu.matmul %40, %42, %cst_24 {dimension_numbers = #tpu.dot_dimension_numbers<[1], [0], [0], [1], [0, 0, 1, 1], [], []>} : vector<128x4xf32>, vector<4x128xf32>, vector<128x128xf32> -> vector<128x128xf32>
    %44 = arith.addf %39, %43 : vector<128x128xf32>
    %c0_25 = arith.constant 0 : index
    %c0_26 = arith.constant 0 : index
    %c2 = arith.constant 2 : index
    %c0_27 = arith.constant 0 : index
    %45 = tpu.strided_load %arg2[%c0_25, %c0_26, %c2, %c0_27] {strides = array<i32: 1, 1, 2, 1>} : memref<2x18x18x4xf32, #tpu.memory_space<vmem>>, vector<2x18x8x4xf32>
    %46 = vector.shape_cast %45 : vector<2x18x8x4xf32> to vector<2x9x2x8x4xf32>
    %47 = vector.extract_strided_slice %46 {offsets = [0, 0, 0, 0, 0], sizes = [2, 8, 1, 8, 4], strides = [1, 1, 1, 1, 1]} : vector<2x9x2x8x4xf32> to vector<2x8x1x8x4xf32>
    %48 = vector.shape_cast %47 : vector<2x8x1x8x4xf32> to vector<2x8x8x4xf32>
    %49 = vector.extract_strided_slice %46 {offsets = [0, 0, 1, 0, 0], sizes = [2, 8, 1, 8, 4], strides = [1, 1, 1, 1, 1]} : vector<2x9x2x8x4xf32> to vector<2x8x1x8x4xf32>
    %50 = vector.shape_cast %49 : vector<2x8x1x8x4xf32> to vector<2x8x8x4xf32>
    %51 = vector.extract_strided_slice %46 {offsets = [0, 1, 0, 0, 0], sizes = [2, 8, 1, 8, 4], strides = [1, 1, 1, 1, 1]} : vector<2x9x2x8x4xf32> to vector<2x8x1x8x4xf32>
    %52 = vector.shape_cast %51 : vector<2x8x1x8x4xf32> to vector<2x8x8x4xf32>
    %53 = vector.shape_cast %48 : vector<2x8x8x4xf32> to vector<128x4xf32>
    %c2_28 = arith.constant 2 : index
    %c0_29 = arith.constant 0 : index
    %c0_30 = arith.constant 0 : index
    %54 = vector.load %arg3[%c2_28, %c0_29, %c0_30] : memref<9x4x128xf32, #tpu.memory_space<vmem>>, vector<1x4x128xf32>
    %55 = vector.shape_cast %54 : vector<1x4x128xf32> to vector<4x128xf32>
    %cst_31 = arith.constant dense<0.000000e+00> : vector<128x128xf32>
    %56 = tpu.matmul %53, %55, %cst_31 {dimension_numbers = #tpu.dot_dimension_numbers<[1], [0], [0], [1], [0, 0, 1, 1], [], []>} : vector<128x4xf32>, vector<4x128xf32>, vector<128x128xf32> -> vector<128x128xf32>
    %57 = arith.addf %44, %56 : vector<128x128xf32>
    %58 = vector.shape_cast %50 : vector<2x8x8x4xf32> to vector<128x4xf32>
    %c5 = arith.constant 5 : index
    %c0_32 = arith.constant 0 : index
    %c0_33 = arith.constant 0 : index
    %59 = vector.load %arg3[%c5, %c0_32, %c0_33] : memref<9x4x128xf32, #tpu.memory_space<vmem>>, vector<1x4x128xf32>
    %60 = vector.shape_cast %59 : vector<1x4x128xf32> to vector<4x128xf32>
    %cst_34 = arith.constant dense<0.000000e+00> : vector<128x128xf32>
    %61 = tpu.matmul %58, %60, %cst_34 {dimension_numbers = #tpu.dot_dimension_numbers<[1], [0], [0], [1], [0, 0, 1, 1], [], []>} : vector<128x4xf32>, vector<4x128xf32>, vector<128x128xf32> -> vector<128x128xf32>
    %62 = arith.addf %57, %61 : vector<128x128xf32>
    %63 = vector.shape_cast %52 : vector<2x8x8x4xf32> to vector<128x4xf32>
    %c8 = arith.constant 8 : index
    %c0_35 = arith.constant 0 : index
    %c0_36 = arith.constant 0 : index
    %64 = vector.load %arg3[%c8, %c0_35, %c0_36] : memref<9x4x128xf32, #tpu.memory_space<vmem>>, vector<1x4x128xf32>
    %65 = vector.shape_cast %64 : vector<1x4x128xf32> to vector<4x128xf32>
    %cst_37 = arith.constant dense<0.000000e+00> : vector<128x128xf32>
    %66 = tpu.matmul %63, %65, %cst_37 {dimension_numbers = #tpu.dot_dimension_numbers<[1], [0], [0], [1], [0, 0, 1, 1], [], []>} : vector<128x4xf32>, vector<4x128xf32>, vector<128x128xf32> -> vector<128x128xf32>
    %67 = arith.addf %62, %66 : vector<128x128xf32>
    %c0_38 = arith.constant 0 : index
    %c0_39 = arith.constant 0 : index
    %68 = vector.load %arg4[%c0_38, %c0_39] : memref<1x128xf32, #tpu.memory_space<vmem>>, vector<1x128xf32>
    %69 = vector.broadcast %68 : vector<1x128xf32> to vector<128x128xf32>
    %70 = arith.addf %67, %69 : vector<128x128xf32>
    %cst_40 = arith.constant 0.000000e+00 : f32
    %71 = vector.broadcast %cst_40 : f32 to vector<128x128xf32>
    %72 = arith.maximumf %70, %71 : vector<128x128xf32>
    %73 = vector.shape_cast %72 : vector<128x128xf32> to vector<2x8x8x128xf32>
    %cst_41 = arith.constant 0.000000e+00 : f32
    %74 = vector.broadcast %cst_41 : f32 to vector<2x1x16x128xf32>
    %c0_42 = arith.constant 0 : index
    %c0_43 = arith.constant 0 : index
    %c0_44 = arith.constant 0 : index
    %c0_45 = arith.constant 0 : index
    %75 = vector.load %arg6[%c0_42, %c0_43, %c0_44, %c0_45] : memref<2x10x16x128xf32, #tpu.memory_space<vmem>>, vector<2x1x16x128xf32>
    tpu.vector_store %arg6[%c0_42, %c0_43, %c0_44, %c0_45], %74 {strides = array<i32>} : memref<2x10x16x128xf32, #tpu.memory_space<vmem>>, vector<2x1x16x128xf32>,
    %cst_46 = arith.constant 0.000000e+00 : f32
    %76 = vector.broadcast %cst_46 : f32 to vector<2x1x16x128xf32>
    %c0_47 = arith.constant 0 : index
    %c9 = arith.constant 9 : index
    %c0_48 = arith.constant 0 : index
    %c0_49 = arith.constant 0 : index
    %77 = vector.load %arg6[%c0_47, %c9, %c0_48, %c0_49] : memref<2x10x16x128xf32, #tpu.memory_space<vmem>>, vector<2x1x16x128xf32>
    tpu.vector_store %arg6[%c0_47, %c9, %c0_48, %c0_49], %76 {strides = array<i32>} : memref<2x10x16x128xf32, #tpu.memory_space<vmem>>, vector<2x1x16x128xf32>,
    %cst_50 = arith.constant 0.000000e+00 : f32
    %78 = vector.broadcast %cst_50 : f32 to vector<2x10x8x128xf32>
    %c0_51 = arith.constant 0 : index
    %c0_52 = arith.constant 0 : index
    %c0_53 = arith.constant 0 : index
    %c0_54 = arith.constant 0 : index
    %79 = vector.load %arg6[%c0_51, %c0_52, %c0_53, %c0_54] : memref<2x10x16x128xf32, #tpu.memory_space<vmem>>, vector<2x10x8x128xf32>
    tpu.vector_store %arg6[%c0_51, %c0_52, %c0_53, %c0_54], %78 {strides = array<i32>} : memref<2x10x16x128xf32, #tpu.memory_space<vmem>>, vector<2x10x8x128xf32>,
    %c0_55 = arith.constant 0 : index
    %c1_56 = arith.constant 1 : index
    %c8_57 = arith.constant 8 : index
    %c0_58 = arith.constant 0 : index
    %80 = vector.load %arg6[%c0_55, %c1_56, %c8_57, %c0_58] : memref<2x10x16x128xf32, #tpu.memory_space<vmem>>, vector<2x8x8x128xf32>
    tpu.vector_store %arg6[%c0_55, %c1_56, %c8_57, %c0_58], %73 {strides = array<i32>} : memref<2x10x16x128xf32, #tpu.memory_space<vmem>>, vector<2x8x8x128xf32>,
    %c0_59 = arith.constant 0 : index
    %c0_60 = arith.constant 0 : index
    %c7_61 = arith.constant 7 : index
    %c0_62 = arith.constant 0 : index
    %81 = tpu.strided_load %arg6[%c0_59, %c0_60, %c7_61, %c0_62] {strides = array<i32: 1, 1, 2, 1>} : memref<2x10x16x128xf32, #tpu.memory_space<vmem>>, vector<2x10x4x128xf32>
    %c0_63 = arith.constant 0 : index
    %c0_64 = arith.constant 0 : index
    %c8_65 = arith.constant 8 : index
    %c0_66 = arith.constant 0 : index
    %82 = tpu.strided_load %arg6[%c0_63, %c0_64, %c8_65, %c0_66] {strides = array<i32: 1, 1, 2, 1>} : memref<2x10x16x128xf32, #tpu.memory_space<vmem>>, vector<2x10x4x128xf32>
    %c0_67 = arith.constant 0 : index
    %c0_68 = arith.constant 0 : index
    %c9_69 = arith.constant 9 : index
    %c0_70 = arith.constant 0 : index
    %83 = tpu.strided_load %arg6[%c0_67, %c0_68, %c9_69, %c0_70] {strides = array<i32: 1, 1, 2, 1>} : memref<2x10x16x128xf32, #tpu.memory_space<vmem>>, vector<2x10x4x128xf32>
    %84 = arith.maximumf %81, %82 : vector<2x10x4x128xf32>
    %85 = arith.maximumf %84, %83 : vector<2x10x4x128xf32>
    %86 = vector.shape_cast %85 : vector<2x10x4x128xf32> to vector<2x5x2x4x128xf32>
    %87 = vector.extract_strided_slice %86 {offsets = [0, 0, 0, 0, 0], sizes = [2, 5, 1, 4, 128], strides = [1, 1, 1, 1, 1]} : vector<2x5x2x4x128xf32> to vector<2x5x1x4x128xf32>
    %88 = vector.shape_cast %87 : vector<2x5x1x4x128xf32> to vector<2x5x4x128xf32>
    %89 = vector.extract_strided_slice %86 {offsets = [0, 0, 1, 0, 0], sizes = [2, 5, 1, 4, 128], strides = [1, 1, 1, 1, 1]} : vector<2x5x2x4x128xf32> to vector<2x5x1x4x128xf32>
    %90 = vector.shape_cast %89 : vector<2x5x1x4x128xf32> to vector<2x5x4x128xf32>
    %91 = vector.extract_strided_slice %88 {offsets = [0, 0, 0, 0], sizes = [2, 4, 4, 128], strides = [1, 1, 1, 1]} : vector<2x5x4x128xf32> to vector<2x4x4x128xf32>
    %92 = vector.extract_strided_slice %90 {offsets = [0, 0, 0, 0], sizes = [2, 4, 4, 128], strides = [1, 1, 1, 1]} : vector<2x5x4x128xf32> to vector<2x4x4x128xf32>
    %93 = arith.maximumf %91, %92 : vector<2x4x4x128xf32>
    %94 = vector.extract_strided_slice %88 {offsets = [0, 1, 0, 0], sizes = [2, 4, 4, 128], strides = [1, 1, 1, 1]} : vector<2x5x4x128xf32> to vector<2x4x4x128xf32>
    %95 = arith.maximumf %93, %94 : vector<2x4x4x128xf32>
    %c0_71 = arith.constant 0 : index
    %c0_72 = arith.constant 0 : index
    %c0_73 = arith.constant 0 : index
    %c0_74 = arith.constant 0 : index
    %96 = vector.load %arg5[%c0_71, %c0_72, %c0_73, %c0_74] : memref<2x4x4x128xf32, #tpu.memory_space<vmem>>, vector<2x4x4x128xf32>
    tpu.vector_store %arg5[%c0_71, %c0_72, %c0_73, %c0_74], %95 {strides = array<i32>} : memref<2x4x4x128xf32, #tpu.memory_space<vmem>>, vector<2x4x4x128xf32>,
    return
  }
  func.func @transform_0(%arg0: i32, %arg1: i32) -> (i32, i32, i32, i32) {
    %c0_i32 = arith.constant 0 : i32
    %c0_i32_0 = arith.constant 0 : i32
    %c0_i32_1 = arith.constant 0 : i32
    %c0_i32_2 = arith.constant 0 : i32
    return %arg0, %c0_i32, %c0_i32_0, %c0_i32_1 : i32, i32, i32, i32
  }
  func.func @transform_1(%arg0: i32, %arg1: i32) -> (i32, i32, i32) {
    %c0_i32 = arith.constant 0 : i32
    %c0_i32_0 = arith.constant 0 : i32
    %c0_i32_1 = arith.constant 0 : i32
    return %c0_i32, %c0_i32_0, %arg1 : i32, i32, i32
  }
  func.func @transform_2(%arg0: i32, %arg1: i32) -> (i32, i32) {
    %c0_i32 = arith.constant 0 : i32
    %c0_i32_0 = arith.constant 0 : i32
    return %c0_i32, %arg1 : i32, i32
  }
  func.func @transform_3(%arg0: i32, %arg1: i32) -> (i32, i32, i32, i32) {
    %c0_i32 = arith.constant 0 : i32
    %c0_i32_0 = arith.constant 0 : i32
    %c0_i32_1 = arith.constant 0 : i32
    return %arg0, %c0_i32, %c0_i32_0, %arg1 : i32, i32, i32, i32
  }
}

</mosaic_0001>

<llo_original>
// kernel: tpu_custom_call.1
$region0: #{tpu_custom_call.1}
  #allocation0 [shape = 'u32[]', space=smem, size = 0x4, offset = 0x4, fixed_abs, tag = 'smem constant byte address 0x4 - core index']
  #allocation1 [shape = 'u32[144,128]{1,0:T(1,128)}', space=vmem, size = 0x12000, scoped, tag = 'internal scratch']
  #allocation2 [shape = 'f32[2,10,16,128]{3,2,1,0:T(8,128)}', space=vmem, size = 0x28000, scoped, tag = 'scratch operand']
  %s0 = inlined_call_operand.vmem [shape: f32[2,18,18,4], index: 0, kind: input, shape index: {}]
  %s1 = inlined_call_operand.vmem [shape: f32[9,4,128], index: 1, kind: input, shape index: {}]
  %s2 = inlined_call_operand.vmem [shape: f32[1,128], index: 2, kind: input, shape index: {}]
  %s3 = inlined_call_operand.hbm [shape: f32[2,4,4,128], index: 3, kind: output, shape index: {}]
  %s4 = sld [smem:[#allocation0]]
  $region22: #{tpu_custom_call.1} parent=0
    _
  %s6 = ssub.s32 1, %s4
  %s7 = scalar_select 0, %s6, %s4
  $region1: #{tpu_custom_call.1} parent=0
    #allocation3 [shape = 'u8[16384]{0}', space=vmem, size = 0x4000, scoped, tag = 'output window, operand 0, single buffered']
    #allocation4 [shape = 's32[1]{0}', space=sflag, size = 0x4, scoped, tag = 'scoped memory for tpu_custom_call.1']
    %8 = vsyncpa [#allocation4], 0
    // Predicated region
    $region2: #{tpu_custom_call.1} parent=1 // pred_check
      _
    $region3: #{tpu_custom_call.1} parent=1 // pred_check_branch
      %10 = sbr.rel (0) target = $region5
    $region4: #{tpu_custom_call.1} parent=1 // pred_region
      _
    $region5: #{tpu_custom_call.1} parent=1 // pred_fallthru
      _
    // Predicated region
    $region6: #{tpu_custom_call.1} parent=1 // pred_check
      _
    $region7: #{tpu_custom_call.1} parent=1 // pred_check_branch
      %12 = sbr.rel (0) target = $region9
    $region8: #{tpu_custom_call.1} parent=1 // pred_region
      _
    $region9: #{tpu_custom_call.1} parent=1 // pred_fallthru
      _
    // Predicated region
    $region10: #{tpu_custom_call.1} parent=1 // pred_check
      _
    $region11: #{tpu_custom_call.1} parent=1 // pred_check_branch
      %14 = sbr.rel (0) target = $region13
    $region12: #{tpu_custom_call.1} parent=1 // pred_region
      _
    $region13: #{tpu_custom_call.1} parent=1 // pred_fallthru
      _
    %v15 = vld [vmem:[%s0] ss:$2 sm:$0xff]
    %s16 = scalar_lea.vmem %s0, 24
    %v17 = vld [vmem:[%s16] ss:$2 sm:$0xff]
    %s18 = scalar_lea.vmem %s0, 48
    %v19 = vld [vmem:[%s18] ss:$2 sm:$0xff]
    %s20 = scalar_lea.vmem %s0, 72
    %v21 = vld [vmem:[%s20] ss:$2 sm:$0xff]
    %s22 = scalar_lea.vmem %s0, 96
    %v23 = vld [vmem:[%s22] ss:$2 sm:$0xff]
    %s24 = scalar_lea.vmem %s0, 120
    %v25 = vld [vmem:[%s24] ss:$2 sm:$0xff]
    %s26 = scalar_lea.vmem %s0, 144
    %v27 = vld [vmem:[%s26] ss:$2 sm:$0xff]
    %s28 = scalar_lea.vmem %s0, 168
    %v29 = vld [vmem:[%s28] ss:$2 sm:$0xff]
    %s30 = scalar_lea.vmem %s0, 192
    %v31 = vld [vmem:[%s30] ss:$2 sm:$0xff]
    %s32 = scalar_lea.vmem %s0, 216
    %v33 = vld [vmem:[%s32] ss:$2 sm:$0xff]
    %s34 = scalar_lea.vmem %s0, 240
    %v35 = vld [vmem:[%s34] ss:$2 sm:$0xff]
    %s36 = scalar_lea.vmem %s0, 264
    %v37 = vld [vmem:[%s36] ss:$2 sm:$0xff]
    %s38 = scalar_lea.vmem %s0, 288
    %v39 = vld [vmem:[%s38] ss:$2 sm:$0xff]
    %s40 = scalar_lea.vmem %s0, 312
    %v41 = vld [vmem:[%s40] ss:$2 sm:$0xff]
    %s42 = scalar_lea.vmem %s0, 336
    %v43 = vld [vmem:[%s42] ss:$2 sm:$0xff]
    %s44 = scalar_lea.vmem %s0, 360
    %v45 = vld [vmem:[%s44] ss:$2 sm:$0xff]
    %s46 = scalar_lea.vmem %s0, 384
    %v47 = vld [vmem:[%s46] ss:$2 sm:$0xff]
    %s48 = scalar_lea.vmem %s0, 432
    %v49 = vld [vmem:[%s48] ss:$2 sm:$0xff]
    %s50 = scalar_lea.vmem %s0, 456
    %v51 = vld [vmem:[%s50] ss:$2 sm:$0xff]
    %s52 = scalar_lea.vmem %s0, 480
    %v53 = vld [vmem:[%s52] ss:$2 sm:$0xff]
    %s54 = scalar_lea.vmem %s0, 504
    %v55 = vld [vmem:[%s54] ss:$2 sm:$0xff]
    %s56 = scalar_lea.vmem %s0, 528
    %v57 = vld [vmem:[%s56] ss:$2 sm:$0xff]
    %s58 = scalar_lea.vmem %s0, 552
    %v59 = vld [vmem:[%s58] ss:$2 sm:$0xff]
    %s60 = scalar_lea.vmem %s0, 576
    %v61 = vld [vmem:[%s60] ss:$2 sm:$0xff]
    %s62 = scalar_lea.vmem %s0, 600
    %v63 = vld [vmem:[%s62] ss:$2 sm:$0xff]
    %s64 = scalar_lea.vmem %s0, 624
    %v65 = vld [vmem:[%s64] ss:$2 sm:$0xff]
    %s66 = scalar_lea.vmem %s0, 648
    %v67 = vld [vmem:[%s66] ss:$2 sm:$0xff]
    %s68 = scalar_lea.vmem %s0, 672
    %v69 = vld [vmem:[%s68] ss:$2 sm:$0xff]
    %s70 = scalar_lea.vmem %s0, 696
    %v71 = vld [vmem:[%s70] ss:$2 sm:$0xff]
    %s72 = scalar_lea.vmem %s0, 720
    %v73 = vld [vmem:[%s72] ss:$2 sm:$0xff]
    %s74 = scalar_lea.vmem %s0, 744
    %v75 = vld [vmem:[%s74] ss:$2 sm:$0xff]
    %s76 = scalar_lea.vmem %s0, 768
    %v77 = vld [vmem:[%s76] ss:$2 sm:$0xff]
    %s78 = scalar_lea.vmem %s0, 792
    %v79 = vld [vmem:[%s78] ss:$2 sm:$0xff]
    %s80 = scalar_lea.vmem %s0, 816
    %v81 = vld [vmem:[%s80] ss:$2 sm:$0xff]
    %v82 = vld [vmem:[%s1] sm:$0xf]
    %s83 = scalar_lea.vmem %s1, 12
    %v84 = vld [vmem:[%s83] sm:$0xf]
    %vm85 = vcmask 31744
    %v87 = vsel %vm85, %v17, 0
    %v90 = vsel %vm85, %v21, 0
    %v93 = vsel %vm85, %v25, 0
    %v96 = vsel %vm85, %v29, 0
    %v99 = vsel %vm85, %v33, 0
    %v102 = vsel %vm85, %v37, 0
    %v105 = vsel %vm85, %v41, 0
    %v108 = vsel %vm85, %v45, 0
    %v111 = vsel %vm85, %v51, 0
    %v114 = vsel %vm85, %v55, 0
    %v117 = vsel %vm85, %v59, 0
    %v120 = vsel %vm85, %v63, 0
    %v123 = vsel %vm85, %v67, 0
    %v126 = vsel %vm85, %v71, 0
    %v129 = vsel %vm85, %v75, 0
    %v132 = vsel %vm85, %v79, 0
    %vm134 = vcmask 1043456
    %v136 = vsel %vm134, %v84, 0
    %138 = vmatprep.subr.mxu0 0.0
    %139 = vmatpush1.msra.mxu0 %v136
    %140 = vmatprep.subr.mxu0 0.0
    %141 = vmatpush1.msra.mxu0 0.0
    %142 = vmatprep.subr.mxu0 0.0
    %143 = vmatpush1.msra.mxu0 0.0
    %144 = vmatprep.subr.mxu0 0.0
    %145 = vmatpush1.msra.mxu0 0.0
    %146 = vmatprep.subr.mxu0 0.0
    %147 = vmatpush1.msra.mxu0 0.0
    %148 = vmatprep.subr.mxu0 0.0
    %149 = vmatpush1.msra.mxu0 0.0
    %150 = vmatprep.subr.mxu0 0.0
    %151 = vmatpush1.msra.mxu0 0.0
    %152 = vmatprep.subr.mxu0 0.0
    %153 = vmatpush1.msra.mxu0 0.0
    %154 = vmatprep.subr.mxu0 0.0
    %155 = vmatpush1.msra.mxu0 0.0
    %156 = vmatprep.subr.mxu0 0.0
    %157 = vmatpush1.msra.mxu0 0.0
    %158 = vmatprep.subr.mxu0 0.0
    %159 = vmatpush1.msra.mxu0 0.0
    %160 = vmatprep.subr.mxu0 0.0
    %161 = vmatpush1.msra.mxu0 0.0
    %162 = vmatprep.subr.mxu0 0.0
    %163 = vmatpush1.msra.mxu0 0.0
    %164 = vmatprep.subr.mxu0 0.0
    %165 = vmatpush1.msra.mxu0 0.0
    %166 = vmatprep.subr.mxu0 0.0
    %167 = vmatpush1.msra.mxu0 0.0
    %168 = vmatprep.subr.mxu0 0.0
    %169 = vmatpush1.msra.mxu0 0.0
    %170 = vmatprep.subr.mxu0 0.0
    %171 = vmatpush1.msra.mxu0 0.0
    %172 = vmatprep.subr.mxu0 0.0
    %173 = vmatpush1.msra.mxu0 0.0
    %174 = vmatprep.subr.mxu0 0.0
    %175 = vmatpush1.msra.mxu0 0.0
    %176 = vmatprep.subr.mxu0 0.0
    %177 = vmatpush1.msra.mxu0 0.0
    %178 = vmatprep.subr.mxu0 0.0
    %179 = vmatpush1.msra.mxu0 0.0
    %180 = vmatprep.subr.mxu0 0.0
    %181 = vmatpush1.msra.mxu0 0.0
    %182 = vmatprep.subr.mxu0 0.0
    %183 = vmatpush1.msra.mxu0 0.0
    %184 = vmatprep.subr.mxu0 0.0
    %185 = vmatpush1.msra.mxu0 0.0
    %186 = vmatprep.subr.mxu0 0.0
    %187 = vmatpush1.msra.mxu0 0.0
    %188 = vmatprep.subr.mxu0 0.0
    %189 = vmatpush1.msra.mxu0 0.0
    %190 = vmatprep.subr.mxu0 0.0
    %191 = vmatpush1.msra.mxu0 0.0
    %192 = vmatprep.subr.mxu0 0.0
    %193 = vmatpush1.msra.mxu0 0.0
    %194 = vmatprep.subr.mxu0 0.0
    %195 = vmatpush1.msra.mxu0 0.0
    %196 = vmatprep.subr.mxu0 0.0
    %197 = vmatpush1.msra.mxu0 0.0
    %198 = vmatprep.subr.mxu0 0.0
    %199 = vmatpush1.msra.mxu0 0.0
    %200 = vmatprep.subr.mxu0 0.0
    %201 = vmatpush1.msra.mxu0 0.0
    %202 = vmatprep.mubr.f32.mxu0 0.0
    %203 = vmatmul.mubr.f32.gmra.mrb[0].mxu0 %v87
    %v204 = vpop.f32.mrb[0].mxu0
    %v205 = vadd.f32 0.0, %v204
    %v206 = vpop.f32.mrb[0].mxu0
    %207 = vmatprep.mubr.f32.mxu0 0.0
    %208 = vmatmul.mubr.f32.gmra.mrb[0].mxu0 %v90
    %v209 = vpop.f32.mrb[0].mxu0
    %v210 = vadd.f32 0.0, %v209
    %v211 = vpop.f32.mrb[0].mxu0
    %212 = vmatprep.mubr.f32.mxu0 0.0
    %213 = vmatmul.mubr.f32.gmra.mrb[0].mxu0 %v93
    %v214 = vpop.f32.mrb[0].mxu0
    %v215 = vadd.f32 0.0, %v214
    %v216 = vpop.f32.mrb[0].mxu0
    %217 = vmatprep.mubr.f32.mxu0 0.0
    %218 = vmatmul.mubr.f32.gmra.mrb[0].mxu0 %v96
    %v219 = vpop.f32.mrb[0].mxu0
    %v220 = vadd.f32 0.0, %v219
    %v221 = vpop.f32.mrb[0].mxu0
    %222 = vmatprep.mubr.f32.mxu0 0.0
    %223 = vmatmul.mubr.f32.gmra.mrb[0].mxu0 %v99
    %v224 = vpop.f32.mrb[0].mxu0
    %v225 = vadd.f32 0.0, %v224
    %v226 = vpop.f32.mrb[0].mxu0
    %227 = vmatprep.mubr.f32.mxu0 0.0
    %228 = vmatmul.mubr.f32.gmra.mrb[0].mxu0 %v102
    %v229 = vpop.f32.mrb[0].mxu0
    %v230 = vadd.f32 0.0, %v229
    %v231 = vpop.f32.mrb[0].mxu0
    %232 = vmatprep.mubr.f32.mxu0 0.0
    %233 = vmatmul.mubr.f32.gmra.mrb[0].mxu0 %v105
    %v234 = vpop.f32.mrb[0].mxu0
    %v235 = vadd.f32 0.0, %v234
    %v236 = vpop.f32.mrb[0].mxu0
    %237 = vmatprep.mubr.f32.mxu0 0.0
    %238 = vmatmul.mubr.f32.gmra.mrb[0].mxu0 %v108
    %v239 = vpop.f32.mrb[0].mxu0
    %v240 = vadd.f32 0.0, %v239
    %v241 = vpop.f32.mrb[0].mxu0
    %242 = vmatprep.mubr.f32.mxu0 0.0
    %243 = vmatmul.mubr.f32.gmra.mrb[0].mxu0 %v111
    %v244 = vpop.f32.mrb[0].mxu0
    %v245 = vadd.f32 0.0, %v244
    %v246 = vpop.f32.mrb[0].mxu0
    %247 = vmatprep.mubr.f32.mxu0 0.0
    %248 = vmatmul.mubr.f32.gmra.mrb[0].mxu0 %v114
    %v249 = vpop.f32.mrb[0].mxu0
    %v250 = vadd.f32 0.0, %v249
    %v251 = vpop.f32.mrb[0].mxu0
    %252 = vmatprep.mubr.f32.mxu0 0.0
    %253 = vmatmul.mubr.f32.gmra.mrb[0].mxu0 %v117
    %v254 = vpop.f32.mrb[0].mxu0
    %v255 = vadd.f32 0.0, %v254
    %v256 = vpop.f32.mrb[0].mxu0
    %257 = vmatprep.mubr.f32.mxu0 0.0
    %258 = vmatmul.mubr.f32.gmra.mrb[0].mxu0 %v120
    %v259 = vpop.f32.mrb[0].mxu0
    %v260 = vadd.f32 0.0, %v259
    %v261 = vpop.f32.mrb[0].mxu0
    %262 = vmatprep.mubr.f32.mxu0 0.0
    %263 = vmatmul.mubr.f32.gmra.mrb[0].mxu0 %v123
    %v264 = vpop.f32.mrb[0].mxu0
    %v265 = vadd.f32 0.0, %v264
    %v266 = vpop.f32.mrb[0].mxu0
    %267 = vmatprep.mubr.f32.mxu0 0.0
    %268 = vmatmul.mubr.f32.gmra.mrb[0].mxu0 %v126
    %v269 = vpop.f32.mrb[0].mxu0
    %v270 = vadd.f32 0.0, %v269
    %v271 = vpop.f32.mrb[0].mxu0
    %272 = vmatprep.mubr.f32.mxu0 0.0
    %273 = vmatmul.mubr.f32.gmra.mrb[0].mxu0 %v129
    %v274 = vpop.f32.mrb[0].mxu0
    %v275 = vadd.f32 0.0, %v274
    %v276 = vpop.f32.mrb[0].mxu0
    %277 = vmatprep.mubr.f32.mxu0 0.0
    %278 = vmatmul.mubr.f32.gmra.mrb[0].mxu0 %v132
    %v279 = vpop.f32.mrb[0].mxu0
    %v280 = vadd.f32 0.0, %v279
    %v281 = vpop.f32.mrb[0].mxu0
    %282 = vdwg.mxu0
    %v284 = vsel %vm85, %v15, 0
    %v287 = vsel %vm85, %v19, 0
    %v290 = vsel %vm85, %v23, 0
    %v293 = vsel %vm85, %v27, 0
    %v296 = vsel %vm85, %v31, 0
    %v299 = vsel %vm85, %v35, 0
    %v302 = vsel %vm85, %v39, 0
    %v305 = vsel %vm85, %v43, 0
    %v308 = vsel %vm85, %v49, 0
    %v311 = vsel %vm85, %v53, 0
    %v314 = vsel %vm85, %v57, 0
    %v317 = vsel %vm85, %v61, 0
    %v320 = vsel %vm85, %v65, 0
    %v323 = vsel %vm85, %v69, 0
    %v326 = vsel %vm85, %v73, 0
    %v329 = vsel %vm85, %v77, 0
    %v332 = vsel %vm134, %v82, 0
    %334 = vmatprep.subr.mxu0 0.0
    %335 = vmatpush1.msra.mxu0 %v332
    %336 = vmatprep.subr.mxu0 0.0
    %337 = vmatpush1.msra.mxu0 0.0
    %338 = vmatprep.subr.mxu0 0.0
    %339 = vmatpush1.msra.mxu0 0.0
    %340 = vmatprep.subr.mxu0 0.0
    %341 = vmatpush1.msra.mxu0 0.0
    %342 = vmatprep.subr.mxu0 0.0
    %343 = vmatpush1.msra.mxu0 0.0
    %344 = vmatprep.subr.mxu0 0.0
    %345 = vmatpush1.msra.mxu0 0.0
    %346 = vmatprep.subr.mxu0 0.0
    %347 = vmatpush1.msra.mxu0 0.0
    %348 = vmatprep.subr.mxu0 0.0
    %349 = vmatpush1.msra.mxu0 0.0
    %350 = vmatprep.subr.mxu0 0.0
    %351 = vmatpush1.msra.mxu0 0.0
    %352 = vmatprep.subr.mxu0 0.0
    %353 = vmatpush1.msra.mxu0 0.0
    %354 = vmatprep.subr.mxu0 0.0
    %355 = vmatpush1.msra.mxu0 0.0
    %356 = vmatprep.subr.mxu0 0.0
    %357 = vmatpush1.msra.mxu0 0.0
    %358 = vmatprep.subr.mxu0 0.0
    %359 = vmatpush1.msra.mxu0 0.0
    %360 = vmatprep.subr.mxu0 0.0
    %361 = vmatpush1.msra.mxu0 0.0
    %362 = vmatprep.subr.mxu0 0.0
    %363 = vmatpush1.msra.mxu0 0.0
    %364 = vmatprep.subr.mxu0 0.0
    %365 = vmatpush1.msra.mxu0 0.0
    %366 = vmatprep.subr.mxu0 0.0
    %367 = vmatpush1.msra.mxu0 0.0
    %368 = vmatprep.subr.mxu0 0.0
    %369 = vmatpush1.msra.mxu0 0.0
    %370 = vmatprep.subr.mxu0 0.0
    %371 = vmatpush1.msra.mxu0 0.0
    %372 = vmatprep.subr.mxu0 0.0
    %373 = vmatpush1.msra.mxu0 0.0
    %374 = vmatprep.subr.mxu0 0.0
    %375 = vmatpush1.msra.mxu0 0.0
    %376 = vmatprep.subr.mxu0 0.0
    %377 = vmatpush1.msra.mxu0 0.0
    %378 = vmatprep.subr.mxu0 0.0
    %379 = vmatpush1.msra.mxu0 0.0
    %380 = vmatprep.subr.mxu0 0.0
    %381 = vmatpush1.msra.mxu0 0.0
    %382 = vmatprep.subr.mxu0 0.0
    %383 = vmatpush1.msra.mxu0 0.0
    %384 = vmatprep.subr.mxu0 0.0
    %385 = vmatpush1.msra.mxu0 0.0
    %386 = vmatprep.subr.mxu0 0.0
    %387 = vmatpush1.msra.mxu0 0.0
    %388 = vmatprep.subr.mxu0 0.0
    %389 = vmatpush1.msra.mxu0 0.0
    %390 = vmatprep.subr.mxu0 0.0
    %391 = vmatpush1.msra.mxu0 0.0
    %392 = vmatprep.subr.mxu0 0.0
    %393 = vmatpush1.msra.mxu0 0.0
    %394 = vmatprep.subr.mxu0 0.0
    %395 = vmatpush1.msra.mxu0 0.0
    %396 = vmatprep.subr.mxu0 0.0
    %397 = vmatpush1.msra.mxu0 0.0
    %398 = vmatprep.mubr.f32.mxu0 0.0
    %399 = vmatmul.mubr.f32.gmra.mrb[0].mxu0 %v284
    %v400 = vpop.f32.mrb[0].mxu0
    %v401 = vadd.f32 %v205, %v400
    %v402 = vpop.f32.mrb[0].mxu0
    %403 = vmatprep.mubr.f32.mxu0 0.0
    %404 = vmatmul.mubr.f32.gmra.mrb[0].mxu0 %v287
    %v405 = vpop.f32.mrb[0].mxu0
    %v406 = vadd.f32 %v210, %v405
    %v407 = vpop.f32.mrb[0].mxu0
    %408 = vmatprep.mubr.f32.mxu0 0.0
    %409 = vmatmul.mubr.f32.gmra.mrb[0].mxu0 %v290
    %v410 = vpop.f32.mrb[0].mxu0
    %v411 = vadd.f32 %v215, %v410
    %v412 = vpop.f32.mrb[0].mxu0
    %413 = vmatprep.mubr.f32.mxu0 0.0
    %414 = vmatmul.mubr.f32.gmra.mrb[0].mxu0 %v293
    %v415 = vpop.f32.mrb[0].mxu0
    %v416 = vadd.f32 %v220, %v415
    %v417 = vpop.f32.mrb[0].mxu0
    %418 = vmatprep.mubr.f32.mxu0 0.0
    %419 = vmatmul.mubr.f32.gmra.mrb[0].mxu0 %v296
    %v420 = vpop.f32.mrb[0].mxu0
    %v421 = vadd.f32 %v225, %v420
    %v422 = vpop.f32.mrb[0].mxu0
    %423 = vmatprep.mubr.f32.mxu0 0.0
    %424 = vmatmul.mubr.f32.gmra.mrb[0].mxu0 %v299
    %v425 = vpop.f32.mrb[0].mxu0
    %v426 = vadd.f32 %v230, %v425
    %v427 = vpop.f32.mrb[0].mxu0
    %428 = vmatprep.mubr.f32.mxu0 0.0
    %429 = vmatmul.mubr.f32.gmra.mrb[0].mxu0 %v302
    %v430 = vpop.f32.mrb[0].mxu0
    %v431 = vadd.f32 %v235, %v430
    %v432 = vpop.f32.mrb[0].mxu0
    %433 = vmatprep.mubr.f32.mxu0 0.0
    %434 = vmatmul.mubr.f32.gmra.mrb[0].mxu0 %v305
    %v435 = vpop.f32.mrb[0].mxu0
    %v436 = vadd.f32 %v240, %v435
    %v437 = vpop.f32.mrb[0].mxu0
    %438 = vmatprep.mubr.f32.mxu0 0.0
    %439 = vmatmul.mubr.f32.gmra.mrb[0].mxu0 %v308
    %v440 = vpop.f32.mrb[0].mxu0
    %v441 = vadd.f32 %v245, %v440
    %v442 = vpop.f32.mrb[0].mxu0
    %443 = vmatprep.mubr.f32.mxu0 0.0
    %444 = vmatmul.mubr.f32.gmra.mrb[0].mxu0 %v311
    %v445 = vpop.f32.mrb[0].mxu0
    %v446 = vadd.f32 %v250, %v445
    %v447 = vpop.f32.mrb[0].mxu0
    %448 = vmatprep.mubr.f32.mxu0 0.0
    %449 = vmatmul.mubr.f32.gmra.mrb[0].mxu0 %v314
    %v450 = vpop.f32.mrb[0].mxu0
    %v451 = vadd.f32 %v255, %v450
    %v452 = vpop.f32.mrb[0].mxu0
    %453 = vmatprep.mubr.f32.mxu0 0.0
    %454 = vmatmul.mubr.f32.gmra.mrb[0].mxu0 %v317
    %v455 = vpop.f32.mrb[0].mxu0
    %v456 = vadd.f32 %v260, %v455
    %v457 = vpop.f32.mrb[0].mxu0
    %458 = vmatprep.mubr.f32.mxu0 0.0
    %459 = vmatmul.mubr.f32.gmra.mrb[0].mxu0 %v320
    %v460 = vpop.f32.mrb[0].mxu0
    %v461 = vadd.f32 %v265, %v460
    %v462 = vpop.f32.mrb[0].mxu0
    %463 = vmatprep.mubr.f32.mxu0 0.0
    %464 = vmatmul.mubr.f32.gmra.mrb[0].mxu0 %v323
    %v465 = vpop.f32.mrb[0].mxu0
    %v466 = vadd.f32 %v270, %v465
    %v467 = vpop.f32.mrb[0].mxu0
    %468 = vmatprep.mubr.f32.mxu0 0.0
    %469 = vmatmul.mubr.f32.gmra.mrb[0].mxu0 %v326
    %v470 = vpop.f32.mrb[0].mxu0
    %v471 = vadd.f32 %v275, %v470
    %v472 = vpop.f32.mrb[0].mxu0
    %473 = vmatprep.mubr.f32.mxu0 0.0
    %474 = vmatmul.mubr.f32.gmra.mrb[0].mxu0 %v329
    %v475 = vpop.f32.mrb[0].mxu0
    %v476 = vadd.f32 %v280, %v475
    %v477 = vpop.f32.mrb[0].mxu0
    %478 = vdwg.mxu0
    %s479 = scalar_lea.vmem %s1, 24
    %v480 = vld [vmem:[%s479] sm:$0xf]
    %v482 = vsel %vm85, %v47, 0
    %v485 = vsel %vm85, %v81, 0
    %v488 = vsel %vm134, %v480, 0
    %490 = vmatprep.subr.mxu0 0.0
    %491 = vmatpush1.msra.mxu0 %v488
    %492 = vmatprep.subr.mxu0 0.0
    %493 = vmatpush1.msra.mxu0 0.0
    %494 = vmatprep.subr.mxu0 0.0
    %495 = vmatpush1.msra.mxu0 0.0
    %496 = vmatprep.subr.mxu0 0.0
    %497 = vmatpush1.msra.mxu0 0.0
    %498 = vmatprep.subr.mxu0 0.0
    %499 = vmatpush1.msra.mxu0 0.0
    %500 = vmatprep.subr.mxu0 0.0
    %501 = vmatpush1.msra.mxu0 0.0
    %502 = vmatprep.subr.mxu0 0.0
    %503 = vmatpush1.msra.mxu0 0.0
    %504 = vmatprep.subr.mxu0 0.0
    %505 = vmatpush1.msra.mxu0 0.0
    %506 = vmatprep.subr.mxu0 0.0
    %507 = vmatpush1.msra.mxu0 0.0
    %508 = vmatprep.subr.mxu0 0.0
    %509 = vmatpush1.msra.mxu0 0.0
    %510 = vmatprep.subr.mxu0 0.0
    %511 = vmatpush1.msra.mxu0 0.0
    %512 = vmatprep.subr.mxu0 0.0
    %513 = vmatpush1.msra.mxu0 0.0
    %514 = vmatprep.subr.mxu0 0.0
    %515 = vmatpush1.msra.mxu0 0.0
    %516 = vmatprep.subr.mxu0 0.0
    %517 = vmatpush1.msra.mxu0 0.0
    %518 = vmatprep.subr.mxu0 0.0
    %519 = vmatpush1.msra.mxu0 0.0
    %520 = vmatprep.subr.mxu0 0.0
    %521 = vmatpush1.msra.mxu0 0.0
    %522 = vmatprep.subr.mxu0 0.0
    %523 = vmatpush1.msra.mxu0 0.0
    %524 = vmatprep.subr.mxu0 0.0
    %525 = vmatpush1.msra.mxu0 0.0
    %526 = vmatprep.subr.mxu0 0.0
    %527 = vmatpush1.msra.mxu0 0.0
    %528 = vmatprep.subr.mxu0 0.0
    %529 = vmatpush1.msra.mxu0 0.0
    %530 = vmatprep.subr.mxu0 0.0
    %531 = vmatpush1.msra.mxu0 0.0
    %532 = vmatprep.subr.mxu0 0.0
    %533 = vmatpush1.msra.mxu0 0.0
    %534 = vmatprep.subr.mxu0 0.0
    %535 = vmatpush1.msra.mxu0 0.0
    %536 = vmatprep.subr.mxu0 0.0
    %537 = vmatpush1.msra.mxu0 0.0
    %538 = vmatprep.subr.mxu0 0.0
    %539 = vmatpush1.msra.mxu0 0.0
    %540 = vmatprep.subr.mxu0 0.0
    %541 = vmatpush1.msra.mxu0 0.0
    %542 = vmatprep.subr.mxu0 0.0
    %543 = vmatpush1.msra.mxu0 0.0
    %544 = vmatprep.subr.mxu0 0.0
    %545 = vmatpush1.msra.mxu0 0.0
    %546 = vmatprep.subr.mxu0 0.0
    %547 = vmatpush1.msra.mxu0 0.0
    %548 = vmatprep.subr.mxu0 0.0
    %549 = vmatpush1.msra.mxu0 0.0
    %550 = vmatprep.subr.mxu0 0.0
    %551 = vmatpush1.msra.mxu0 0.0
    %552 = vmatprep.subr.mxu0 0.0
    %553 = vmatpush1.msra.mxu0 0.0
    %554 = vmatprep.mubr.f32.mxu0 0.0
    %555 = vmatmul.mubr.f32.gmra.mrb[0].mxu0 %v287
    %v556 = vpop.f32.mrb[0].mxu0
    %v557 = vadd.f32 0.0, %v556
    %v558 = vpop.f32.mrb[0].mxu0
    %559 = vmatprep.mubr.f32.mxu0 0.0
    %560 = vmatmul.mubr.f32.gmra.mrb[0].mxu0 %v290
    %v561 = vpop.f32.mrb[0].mxu0
    %v562 = vadd.f32 0.0, %v561
    %v563 = vpop.f32.mrb[0].mxu0
    %564 = vmatprep.mubr.f32.mxu0 0.0
    %565 = vmatmul.mubr.f32.gmra.mrb[0].mxu0 %v293
    %v566 = vpop.f32.mrb[0].mxu0
    %v567 = vadd.f32 0.0, %v566
    %v568 = vpop.f32.mrb[0].mxu0
    %569 = vmatprep.mubr.f32.mxu0 0.0
    %570 = vmatmul.mubr.f32.gmra.mrb[0].mxu0 %v296
    %v571 = vpop.f32.mrb[0].mxu0
    %v572 = vadd.f32 0.0, %v571
    %v573 = vpop.f32.mrb[0].mxu0
    %574 = vmatprep.mubr.f32.mxu0 0.0
    %575 = vmatmul.mubr.f32.gmra.mrb[0].mxu0 %v299
    %v576 = vpop.f32.mrb[0].mxu0
    %v577 = vadd.f32 0.0, %v576
    %v578 = vpop.f32.mrb[0].mxu0
    %579 = vmatprep.mubr.f32.mxu0 0.0
    %580 = vmatmul.mubr.f32.gmra.mrb[0].mxu0 %v302
    %v581 = vpop.f32.mrb[0].mxu0
    %v582 = vadd.f32 0.0, %v581
    %v583 = vpop.f32.mrb[0].mxu0
    %584 = vmatprep.mubr.f32.mxu0 0.0
    %585 = vmatmul.mubr.f32.gmra.mrb[0].mxu0 %v305
    %v586 = vpop.f32.mrb[0].mxu0
    %v587 = vadd.f32 0.0, %v586
    %v588 = vpop.f32.mrb[0].mxu0
    %589 = vmatprep.mubr.f32.mxu0 0.0
    %590 = vmatmul.mubr.f32.gmra.mrb[0].mxu0 %v482
    %v591 = vpop.f32.mrb[0].mxu0
    %v592 = vadd.f32 0.0, %v591
    %v593 = vpop.f32.mrb[0].mxu0
    %594 = vmatprep.mubr.f32.mxu0 0.0
    %595 = vmatmul.mubr.f32.gmra.mrb[0].mxu0 %v311
    %v596 = vpop.f32.mrb[0].mxu0
    %v597 = vadd.f32 0.0, %v596
    %v598 = vpop.f32.mrb[0].mxu0
    %599 = vmatprep.mubr.f32.mxu0 0.0
    %600 = vmatmul.mubr.f32.gmra.mrb[0].mxu0 %v314
    %v601 = vpop.f32.mrb[0].mxu0
    %v602 = vadd.f32 0.0, %v601
    %v603 = vpop.f32.mrb[0].mxu0
    %604 = vmatprep.mubr.f32.mxu0 0.0
    %605 = vmatmul.mubr.f32.gmra.mrb[0].mxu0 %v317
    %v606 = vpop.f32.mrb[0].mxu0
    %v607 = vadd.f32 0.0, %v606
    %v608 = vpop.f32.mrb[0].mxu0
    %609 = vmatprep.mubr.f32.mxu0 0.0
    %610 = vmatmul.mubr.f32.gmra.mrb[0].mxu0 %v320
    %v611 = vpop.f32.mrb[0].mxu0
    %v612 = vadd.f32 0.0, %v611
    %v613 = vpop.f32.mrb[0].mxu0
    %614 = vmatprep.mubr.f32.mxu0 0.0
    %615 = vmatmul.mubr.f32.gmra.mrb[0].mxu0 %v323
    %v616 = vpop.f32.mrb[0].mxu0
    %v617 = vadd.f32 0.0, %v616
    %v618 = vpop.f32.mrb[0].mxu0
    %619 = vmatprep.mubr.f32.mxu0 0.0
    %620 = vmatmul.mubr.f32.gmra.mrb[0].mxu0 %v326
    %v621 = vpop.f32.mrb[0].mxu0
    %v622 = vadd.f32 0.0, %v621
    %v623 = vpop.f32.mrb[0].mxu0
    %624 = vmatprep.mubr.f32.mxu0 0.0
    %625 = vmatmul.mubr.f32.gmra.mrb[0].mxu0 %v329
    %v626 = vpop.f32.mrb[0].mxu0
    %v627 = vadd.f32 0.0, %v626
    %v628 = vpop.f32.mrb[0].mxu0
    %629 = vmatprep.mubr.f32.mxu0 0.0
    %630 = vmatmul.mubr.f32.gmra.mrb[0].mxu0 %v485
    %v631 = vpop.f32.mrb[0].mxu0
    %v632 = vadd.f32 0.0, %v631
    %v633 = vpop.f32.mrb[0].mxu0
    %634 = vdwg.mxu0
    %v635 = vadd.f32 %v401, %v557
    %v636 = vadd.f32 %v406, %v562
    %v637 = vadd.f32 %v411, %v567
    %v638 = vadd.f32 %v416, %v572
    %v639 = vadd.f32 %v421, %v577
    %v640 = vadd.f32 %v426, %v582
    %v641 = vadd.f32 %v431, %v587
    %v642 = vadd.f32 %v436, %v592
    %v643 = vadd.f32 %v441, %v597
    %v644 = vadd.f32 %v446, %v602
    %v645 = vadd.f32 %v451, %v607
    %v646 = vadd.f32 %v456, %v612
    %v647 = vadd.f32 %v461, %v617
    %v648 = vadd.f32 %v466, %v622
    %v649 = vadd.f32 %v471, %v627
    %v650 = vadd.f32 %v476, %v632
    %s651 = scalar_lea.vmem %s0, 1
    %v652 = vld [vmem:[%s651] ss:$2 sm:$0xff]
    %s653 = scalar_lea.vmem %s0, 25
    %v654 = vld [vmem:[%s653] ss:$2 sm:$0xff]
    %s655 = scalar_lea.vmem %s0, 49
    %v656 = vld [vmem:[%s655] ss:$2 sm:$0xff]
    %s657 = scalar_lea.vmem %s0, 73
    %v658 = vld [vmem:[%s657] ss:$2 sm:$0xff]
    %s659 = scalar_lea.vmem %s0, 97
    %v660 = vld [vmem:[%s659] ss:$2 sm:$0xff]
    %s661 = scalar_lea.vmem %s0, 121
    %v662 = vld [vmem:[%s661] ss:$2 sm:$0xff]
    %s663 = scalar_lea.vmem %s0, 145
    %v664 = vld [vmem:[%s663] ss:$2 sm:$0xff]
    %s665 = scalar_lea.vmem %s0, 169
    %v666 = vld [vmem:[%s665] ss:$2 sm:$0xff]
    %s667 = scalar_lea.vmem %s0, 193
    %v668 = vld [vmem:[%s667] ss:$2 sm:$0xff]
    %s669 = scalar_lea.vmem %s0, 217
    %v670 = vld [vmem:[%s669] ss:$2 sm:$0xff]
    %s671 = scalar_lea.vmem %s0, 241
    %v672 = vld [vmem:[%s671] ss:$2 sm:$0xff]
    %s673 = scalar_lea.vmem %s0, 265
    %v674 = vld [vmem:[%s673] ss:$2 sm:$0xff]
    %s675 = scalar_lea.vmem %s0, 289
    %v676 = vld [vmem:[%s675] ss:$2 sm:$0xff]
    %s677 = scalar_lea.vmem %s0, 313
    %v678 = vld [vmem:[%s677] ss:$2 sm:$0xff]
    %s679 = scalar_lea.vmem %s0, 337
    %v680 = vld [vmem:[%s679] ss:$2 sm:$0xff]
    %s681 = scalar_lea.vmem %s0, 361
    %v682 = vld [vmem:[%s681] ss:$2 sm:$0xff]
    %s683 = scalar_lea.vmem %s0, 385
    %v684 = vld [vmem:[%s683] ss:$2 sm:$0xff]
    %s685 = scalar_lea.vmem %s0, 433
    %v686 = vld [vmem:[%s685] ss:$2 sm:$0xff]
    %s687 = scalar_lea.vmem %s0, 457
    %v688 = vld [vmem:[%s687] ss:$2 sm:$0xff]
    %s689 = scalar_lea.vmem %s0, 481
    %v690 = vld [vmem:[%s689] ss:$2 sm:$0xff]
    %s691 = scalar_lea.vmem %s0, 505
    %v692 = vld [vmem:[%s691] ss:$2 sm:$0xff]
    %s693 = scalar_lea.vmem %s0, 529
    %v694 = vld [vmem:[%s693] ss:$2 sm:$0xff]
    %s695 = scalar_lea.vmem %s0, 553
    %v696 = vld [vmem:[%s695] ss:$2 sm:$0xff]
    %s697 = scalar_lea.vmem %s0, 577
    %v698 = vld [vmem:[%s697] ss:$2 sm:$0xff]
    %s699 = scalar_lea.vmem %s0, 601
    %v700 = vld [vmem:[%s699] ss:$2 sm:$0xff]
    %s701 = scalar_lea.vmem %s0, 625
    %v702 = vld [vmem:[%s701] ss:$2 sm:$0xff]
    %s703 = scalar_lea.vmem %s0, 649
    %v704 = vld [vmem:[%s703] ss:$2 sm:$0xff]
    %s705 = scalar_lea.vmem %s0, 673
    %v706 = vld [vmem:[%s705] ss:$2 sm:$0xff]
    %s707 = scalar_lea.vmem %s0, 697
    %v708 = vld [vmem:[%s707] ss:$2 sm:$0xff]
    %s709 = scalar_lea.vmem %s0, 721
    %v710 = vld [vmem:[%s709] ss:$2 sm:$0xff]
    %s711 = scalar_lea.vmem %s0, 745
    %v712 = vld [vmem:[%s711] ss:$2 sm:$0xff]
    %s713 = scalar_lea.vmem %s0, 769
    %v714 = vld [vmem:[%s713] ss:$2 sm:$0xff]
    %s715 = scalar_lea.vmem %s0, 793
    %v716 = vld [vmem:[%s715] ss:$2 sm:$0xff]
    %s717 = scalar_lea.vmem %s0, 817
    %v718 = vld [vmem:[%s717] ss:$2 sm:$0xff]
    %s719 = scalar_lea.vmem %s1, 4
    %v720 = vld [vmem:[%s719] sm:$0xf]
    %v722 = vsel %vm85, %v652, 0
    %v725 = vsel %vm85, %v656, 0
    %v728 = vsel %vm85, %v660, 0
    %v731 = vsel %vm85, %v664, 0
    %v734 = vsel %vm85, %v668, 0
    %v737 = vsel %vm85, %v672, 0
    %v740 = vsel %vm85, %v676, 0
    %v743 = vsel %vm85, %v680, 0
    %v746 = vsel %vm85, %v686, 0
    %v749 = vsel %vm85, %v690, 0
    %v752 = vsel %vm85, %v694, 0
    %v755 = vsel %vm85, %v698, 0
    %v758 = vsel %vm85, %v702, 0
    %v761 = vsel %vm85, %v706, 0
    %v764 = vsel %vm85, %v710, 0
    %v767 = vsel %vm85, %v714, 0
    %v770 = vsel %vm134, %v720, 0
    %772 = vmatprep.subr.mxu0 0.0
    %773 = vmatpush1.msra.mxu0 %v770
    %774 = vmatprep.subr.mxu0 0.0
    %775 = vmatpush1.msra.mxu0 0.0
    %776 = vmatprep.subr.mxu0 0.0
    %777 = vmatpush1.msra.mxu0 0.0
    %778 = vmatprep.subr.mxu0 0.0
    %779 = vmatpush1.msra.mxu0 0.0
    %780 = vmatprep.subr.mxu0 0.0
    %781 = vmatpush1.msra.mxu0 0.0
    %782 = vmatprep.subr.mxu0 0.0
    %783 = vmatpush1.msra.mxu0 0.0
    %784 = vmatprep.subr.mxu0 0.0
    %785 = vmatpush1.msra.mxu0 0.0
    %786 = vmatprep.subr.mxu0 0.0
    %787 = vmatpush1.msra.mxu0 0.0
    %788 = vmatprep.subr.mxu0 0.0
    %789 = vmatpush1.msra.mxu0 0.0
    %790 = vmatprep.subr.mxu0 0.0
    %791 = vmatpush1.msra.mxu0 0.0
    %792 = vmatprep.subr.mxu0 0.0
    %793 = vmatpush1.msra.mxu0 0.0
    %794 = vmatprep.subr.mxu0 0.0
    %795 = vmatpush1.msra.mxu0 0.0
    %796 = vmatprep.subr.mxu0 0.0
    %797 = vmatpush1.msra.mxu0 0.0
    %798 = vmatprep.subr.mxu0 0.0
    %799 = vmatpush1.msra.mxu0 0.0
    %800 = vmatprep.subr.mxu0 0.0
    %801 = vmatpush1.msra.mxu0 0.0
    %802 = vmatprep.subr.mxu0 0.0
    %803 = vmatpush1.msra.mxu0 0.0
    %804 = vmatprep.subr.mxu0 0.0
    %805 = vmatpush1.msra.mxu0 0.0
    %806 = vmatprep.subr.mxu0 0.0
    %807 = vmatpush1.msra.mxu0 0.0
    %808 = vmatprep.subr.mxu0 0.0
    %809 = vmatpush1.msra.mxu0 0.0
    %810 = vmatprep.subr.mxu0 0.0
    %811 = vmatpush1.msra.mxu0 0.0
    %812 = vmatprep.subr.mxu0 0.0
    %813 = vmatpush1.msra.mxu0 0.0
    %814 = vmatprep.subr.mxu0 0.0
    %815 = vmatpush1.msra.mxu0 0.0
    %816 = vmatprep.subr.mxu0 0.0
    %817 = vmatpush1.msra.mxu0 0.0
    %818 = vmatprep.subr.mxu0 0.0
    %819 = vmatpush1.msra.mxu0 0.0
    %820 = vmatprep.subr.mxu0 0.0
    %821 = vmatpush1.msra.mxu0 0.0
    %822 = vmatprep.subr.mxu0 0.0
    %823 = vmatpush1.msra.mxu0 0.0
    %824 = vmatprep.subr.mxu0 0.0
    %825 = vmatpush1.msra.mxu0 0.0
    %826 = vmatprep.subr.mxu0 0.0
    %827 = vmatpush1.msra.mxu0 0.0
    %828 = vmatprep.subr.mxu0 0.0
    %829 = vmatpush1.msra.mxu0 0.0
    %830 = vmatprep.subr.mxu0 0.0
    %831 = vmatpush1.msra.mxu0 0.0
    %832 = vmatprep.subr.mxu0 0.0
    %833 = vmatpush1.msra.mxu0 0.0
    %834 = vmatprep.subr.mxu0 0.0
    %835 = vmatpush1.msra.mxu0 0.0
    %836 = vmatprep.mubr.f32.mxu0 0.0
    %837 = vmatmul.mubr.f32.gmra.mrb[0].mxu0 %v722
    %v838 = vpop.f32.mrb[0].mxu0
    %v839 = vadd.f32 0.0, %v838
    %v840 = vpop.f32.mrb[0].mxu0
    %841 = vmatprep.mubr.f32.mxu0 0.0
    %842 = vmatmul.mubr.f32.gmra.mrb[0].mxu0 %v725
    %v843 = vpop.f32.mrb[0].mxu0
    %v844 = vadd.f32 0.0, %v843
    %v845 = vpop.f32.mrb[0].mxu0
    %846 = vmatprep.mubr.f32.mxu0 0.0
    %847 = vmatmul.mubr.f32.gmra.mrb[0].mxu0 %v728
    %v848 = vpop.f32.mrb[0].mxu0
    %v849 = vadd.f32 0.0, %v848
    %v850 = vpop.f32.mrb[0].mxu0
    %851 = vmatprep.mubr.f32.mxu0 0.0
    %852 = vmatmul.mubr.f32.gmra.mrb[0].mxu0 %v731
    %v853 = vpop.f32.mrb[0].mxu0
    %v854 = vadd.f32 0.0, %v853
    %v855 = vpop.f32.mrb[0].mxu0
    %856 = vmatprep.mubr.f32.mxu0 0.0
    %857 = vmatmul.mubr.f32.gmra.mrb[0].mxu0 %v734
    %v858 = vpop.f32.mrb[0].mxu0
    %v859 = vadd.f32 0.0, %v858
    %v860 = vpop.f32.mrb[0].mxu0
    %861 = vmatprep.mubr.f32.mxu0 0.0
    %862 = vmatmul.mubr.f32.gmra.mrb[0].mxu0 %v737
    %v863 = vpop.f32.mrb[0].mxu0
    %v864 = vadd.f32 0.0, %v863
    %v865 = vpop.f32.mrb[0].mxu0
    %866 = vmatprep.mubr.f32.mxu0 0.0
    %867 = vmatmul.mubr.f32.gmra.mrb[0].mxu0 %v740
    %v868 = vpop.f32.mrb[0].mxu0
    %v869 = vadd.f32 0.0, %v868
    %v870 = vpop.f32.mrb[0].mxu0
    %871 = vmatprep.mubr.f32.mxu0 0.0
    %872 = vmatmul.mubr.f32.gmra.mrb[0].mxu0 %v743
    %v873 = vpop.f32.mrb[0].mxu0
    %v874 = vadd.f32 0.0, %v873
    %v875 = vpop.f32.mrb[0].mxu0
    %876 = vmatprep.mubr.f32.mxu0 0.0
    %877 = vmatmul.mubr.f32.gmra.mrb[0].mxu0 %v746
    %v878 = vpop.f32.mrb[0].mxu0
    %v879 = vadd.f32 0.0, %v878
    %v880 = vpop.f32.mrb[0].mxu0
    %881 = vmatprep.mubr.f32.mxu0 0.0
    %882 = vmatmul.mubr.f32.gmra.mrb[0].mxu0 %v749
    %v883 = vpop.f32.mrb[0].mxu0
    %v884 = vadd.f32 0.0, %v883
    %v885 = vpop.f32.mrb[0].mxu0
    %886 = vmatprep.mubr.f32.mxu0 0.0
    %887 = vmatmul.mubr.f32.gmra.mrb[0].mxu0 %v752
    %v888 = vpop.f32.mrb[0].mxu0
    %v889 = vadd.f32 0.0, %v888
    %v890 = vpop.f32.mrb[0].mxu0
    %891 = vmatprep.mubr.f32.mxu0 0.0
    %892 = vmatmul.mubr.f32.gmra.mrb[0].mxu0 %v755
    %v893 = vpop.f32.mrb[0].mxu0
    %v894 = vadd.f32 0.0, %v893
    %v895 = vpop.f32.mrb[0].mxu0
    %896 = vmatprep.mubr.f32.mxu0 0.0
    %897 = vmatmul.mubr.f32.gmra.mrb[0].mxu0 %v758
    %v898 = vpop.f32.mrb[0].mxu0
    %v899 = vadd.f32 0.0, %v898
    %v900 = vpop.f32.mrb[0].mxu0
    %901 = vmatprep.mubr.f32.mxu0 0.0
    %902 = vmatmul.mubr.f32.gmra.mrb[0].mxu0 %v761
    %v903 = vpop.f32.mrb[0].mxu0
    %v904 = vadd.f32 0.0, %v903
    %v905 = vpop.f32.mrb[0].mxu0
    %906 = vmatprep.mubr.f32.mxu0 0.0
    %907 = vmatmul.mubr.f32.gmra.mrb[0].mxu0 %v764
    %v908 = vpop.f32.mrb[0].mxu0
    %v909 = vadd.f32 0.0, %v908
    %v910 = vpop.f32.mrb[0].mxu0
    %911 = vmatprep.mubr.f32.mxu0 0.0
    %912 = vmatmul.mubr.f32.gmra.mrb[0].mxu0 %v767
    %v913 = vpop.f32.mrb[0].mxu0
    %v914 = vadd.f32 0.0, %v913
    %v915 = vpop.f32.mrb[0].mxu0
    %916 = vdwg.mxu0
    %v917 = vadd.f32 %v635, %v839
    %v918 = vadd.f32 %v636, %v844
    %v919 = vadd.f32 %v637, %v849
    %v920 = vadd.f32 %v638, %v854
    %v921 = vadd.f32 %v639, %v859
    %v922 = vadd.f32 %v640, %v864
    %v923 = vadd.f32 %v641, %v869
    %v924 = vadd.f32 %v642, %v874
    %v925 = vadd.f32 %v643, %v879
    %v926 = vadd.f32 %v644, %v884
    %v927 = vadd.f32 %v645, %v889
    %v928 = vadd.f32 %v646, %v894
    %v929 = vadd.f32 %v647, %v899
    %v930 = vadd.f32 %v648, %v904
    %v931 = vadd.f32 %v649, %v909
    %v932 = vadd.f32 %v650, %v914
    %s933 = scalar_lea.vmem %s1, 16
    %v934 = vld [vmem:[%s933] sm:$0xf]
    %v936 = vsel %vm85, %v654, 0
    %v939 = vsel %vm85, %v658, 0
    %v942 = vsel %vm85, %v662, 0
    %v945 = vsel %vm85, %v666, 0
    %v948 = vsel %vm85, %v670, 0
    %v951 = vsel %vm85, %v674, 0
    %v954 = vsel %vm85, %v678, 0
    %v957 = vsel %vm85, %v682, 0
    %v960 = vsel %vm85, %v688, 0
    %v963 = vsel %vm85, %v692, 0
    %v966 = vsel %vm85, %v696, 0
    %v969 = vsel %vm85, %v700, 0
    %v972 = vsel %vm85, %v704, 0
    %v975 = vsel %vm85, %v708, 0
    %v978 = vsel %vm85, %v712, 0
    %v981 = vsel %vm85, %v716, 0
    %v984 = vsel %vm134, %v934, 0
    %986 = vmatprep.subr.mxu0 0.0
    %987 = vmatpush1.msra.mxu0 %v984
    %988 = vmatprep.subr.mxu0 0.0
    %989 = vmatpush1.msra.mxu0 0.0
    %990 = vmatprep.subr.mxu0 0.0
    %991 = vmatpush1.msra.mxu0 0.0
    %992 = vmatprep.subr.mxu0 0.0
    %993 = vmatpush1.msra.mxu0 0.0
    %994 = vmatprep.subr.mxu0 0.0
    %995 = vmatpush1.msra.mxu0 0.0
    %996 = vmatprep.subr.mxu0 0.0
    %997 = vmatpush1.msra.mxu0 0.0
    %998 = vmatprep.subr.mxu0 0.0
    %999 = vmatpush1.msra.mxu0 0.0
    %1000 = vmatprep.subr.mxu0 0.0
    %1001 = vmatpush1.msra.mxu0 0.0
    %1002 = vmatprep.subr.mxu0 0.0
    %1003 = vmatpush1.msra.mxu0 0.0
    %1004 = vmatprep.subr.mxu0 0.0
    %1005 = vmatpush1.msra.mxu0 0.0
    %1006 = vmatprep.subr.mxu0 0.0
    %1007 = vmatpush1.msra.mxu0 0.0
    %1008 = vmatprep.subr.mxu0 0.0
    %1009 = vmatpush1.msra.mxu0 0.0
    %1010 = vmatprep.subr.mxu0 0.0
    %1011 = vmatpush1.msra.mxu0 0.0
    %1012 = vmatprep.subr.mxu0 0.0
    %1013 = vmatpush1.msra.mxu0 0.0
    %1014 = vmatprep.subr.mxu0 0.0
    %1015 = vmatpush1.msra.mxu0 0.0
    %1016 = vmatprep.subr.mxu0 0.0
    %1017 = vmatpush1.msra.mxu0 0.0
    %1018 = vmatprep.subr.mxu0 0.0
    %1019 = vmatpush1.msra.mxu0 0.0
    %1020 = vmatprep.subr.mxu0 0.0
    %1021 = vmatpush1.msra.mxu0 0.0
    %1022 = vmatprep.subr.mxu0 0.0
    %1023 = vmatpush1.msra.mxu0 0.0
    %1024 = vmatprep.subr.mxu0 0.0
    %1025 = vmatpush1.msra.mxu0 0.0
    %1026 = vmatprep.subr.mxu0 0.0
    %1027 = vmatpush1.msra.mxu0 0.0
    %1028 = vmatprep.subr.mxu0 0.0
    %1029 = vmatpush1.msra.mxu0 0.0
    %1030 = vmatprep.subr.mxu0 0.0
    %1031 = vmatpush1.msra.mxu0 0.0
    %1032 = vmatprep.subr.mxu0 0.0
    %1033 = vmatpush1.msra.mxu0 0.0
    %1034 = vmatprep.subr.mxu0 0.0
    %1035 = vmatpush1.msra.mxu0 0.0
    %1036 = vmatprep.subr.mxu0 0.0
    %1037 = vmatpush1.msra.mxu0 0.0
    %1038 = vmatprep.subr.mxu0 0.0
    %1039 = vmatpush1.msra.mxu0 0.0
    %1040 = vmatprep.subr.mxu0 0.0
    %1041 = vmatpush1.msra.mxu0 0.0
    %1042 = vmatprep.subr.mxu0 0.0
    %1043 = vmatpush1.msra.mxu0 0.0
    %1044 = vmatprep.subr.mxu0 0.0
    %1045 = vmatpush1.msra.mxu0 0.0
    %1046 = vmatprep.subr.mxu0 0.0
    %1047 = vmatpush1.msra.mxu0 0.0
    %1048 = vmatprep.subr.mxu0 0.0
    %1049 = vmatpush1.msra.mxu0 0.0
    %1050 = vmatprep.mubr.f32.mxu0 0.0
    %1051 = vmatmul.mubr.f32.gmra.mrb[0].mxu0 %v936
    %v1052 = vpop.f32.mrb[0].mxu0
    %v1053 = vadd.f32 0.0, %v1052
    %v1054 = vpop.f32.mrb[0].mxu0
    %1055 = vmatprep.mubr.f32.mxu0 0.0
    %1056 = vmatmul.mubr.f32.gmra.mrb[0].mxu0 %v939
    %v1057 = vpop.f32.mrb[0].mxu0
    %v1058 = vadd.f32 0.0, %v1057
    %v1059 = vpop.f32.mrb[0].mxu0
    %1060 = vmatprep.mubr.f32.mxu0 0.0
    %1061 = vmatmul.mubr.f32.gmra.mrb[0].mxu0 %v942
    %v1062 = vpop.f32.mrb[0].mxu0
    %v1063 = vadd.f32 0.0, %v1062
    %v1064 = vpop.f32.mrb[0].mxu0
    %1065 = vmatprep.mubr.f32.mxu0 0.0
    %1066 = vmatmul.mubr.f32.gmra.mrb[0].mxu0 %v945
    %v1067 = vpop.f32.mrb[0].mxu0
    %v1068 = vadd.f32 0.0, %v1067
    %v1069 = vpop.f32.mrb[0].mxu0
    %1070 = vmatprep.mubr.f32.mxu0 0.0
    %1071 = vmatmul.mubr.f32.gmra.mrb[0].mxu0 %v948
    %v1072 = vpop.f32.mrb[0].mxu0
    %v1073 = vadd.f32 0.0, %v1072
    %v1074 = vpop.f32.mrb[0].mxu0
    %1075 = vmatprep.mubr.f32.mxu0 0.0
    %1076 = vmatmul.mubr.f32.gmra.mrb[0].mxu0 %v951
    %v1077 = vpop.f32.mrb[0].mxu0
    %v1078 = vadd.f32 0.0, %v1077
    %v1079 = vpop.f32.mrb[0].mxu0
    %1080 = vmatprep.mubr.f32.mxu0 0.0
    %1081 = vmatmul.mubr.f32.gmra.mrb[0].mxu0 %v954
    %v1082 = vpop.f32.mrb[0].mxu0
    %v1083 = vadd.f32 0.0, %v1082
    %v1084 = vpop.f32.mrb[0].mxu0
    %1085 = vmatprep.mubr.f32.mxu0 0.0
    %1086 = vmatmul.mubr.f32.gmra.mrb[0].mxu0 %v957
    %v1087 = vpop.f32.mrb[0].mxu0
    %v1088 = vadd.f32 0.0, %v1087
    %v1089 = vpop.f32.mrb[0].mxu0
    %1090 = vmatprep.mubr.f32.mxu0 0.0
    %1091 = vmatmul.mubr.f32.gmra.mrb[0].mxu0 %v960
    %v1092 = vpop.f32.mrb[0].mxu0
    %v1093 = vadd.f32 0.0, %v1092
    %v1094 = vpop.f32.mrb[0].mxu0
    %1095 = vmatprep.mubr.f32.mxu0 0.0
    %1096 = vmatmul.mubr.f32.gmra.mrb[0].mxu0 %v963
    %v1097 = vpop.f32.mrb[0].mxu0
    %v1098 = vadd.f32 0.0, %v1097
    %v1099 = vpop.f32.mrb[0].mxu0
    %1100 = vmatprep.mubr.f32.mxu0 0.0
    %1101 = vmatmul.mubr.f32.gmra.mrb[0].mxu0 %v966
    %v1102 = vpop.f32.mrb[0].mxu0
    %v1103 = vadd.f32 0.0, %v1102
    %v1104 = vpop.f32.mrb[0].mxu0
    %1105 = vmatprep.mubr.f32.mxu0 0.0
    %1106 = vmatmul.mubr.f32.gmra.mrb[0].mxu0 %v969
    %v1107 = vpop.f32.mrb[0].mxu0
    %v1108 = vadd.f32 0.0, %v1107
    %v1109 = vpop.f32.mrb[0].mxu0
    %1110 = vmatprep.mubr.f32.mxu0 0.0
    %1111 = vmatmul.mubr.f32.gmra.mrb[0].mxu0 %v972
    %v1112 = vpop.f32.mrb[0].mxu0
    %v1113 = vadd.f32 0.0, %v1112
    %v1114 = vpop.f32.mrb[0].mxu0
    %1115 = vmatprep.mubr.f32.mxu0 0.0
    %1116 = vmatmul.mubr.f32.gmra.mrb[0].mxu0 %v975
    %v1117 = vpop.f32.mrb[0].mxu0
    %v1118 = vadd.f32 0.0, %v1117
    %v1119 = vpop.f32.mrb[0].mxu0
    %1120 = vmatprep.mubr.f32.mxu0 0.0
    %1121 = vmatmul.mubr.f32.gmra.mrb[0].mxu0 %v978
    %v1122 = vpop.f32.mrb[0].mxu0
    %v1123 = vadd.f32 0.0, %v1122
    %v1124 = vpop.f32.mrb[0].mxu0
    %1125 = vmatprep.mubr.f32.mxu0 0.0
    %1126 = vmatmul.mubr.f32.gmra.mrb[0].mxu0 %v981
    %v1127 = vpop.f32.mrb[0].mxu0
    %v1128 = vadd.f32 0.0, %v1127
    %v1129 = vpop.f32.mrb[0].mxu0
    %1130 = vdwg.mxu0
    %v1131 = vadd.f32 %v917, %v1053
    %v1132 = vadd.f32 %v918, %v1058
    %v1133 = vadd.f32 %v919, %v1063
    %v1134 = vadd.f32 %v920, %v1068
    %v1135 = vadd.f32 %v921, %v1073
    %v1136 = vadd.f32 %v922, %v1078
    %v1137 = vadd.f32 %v923, %v1083
    %v1138 = vadd.f32 %v924, %v1088
    %v1139 = vadd.f32 %v925, %v1093
    %v1140 = vadd.f32 %v926, %v1098
    %v1141 = vadd.f32 %v927, %v1103
    %v1142 = vadd.f32 %v928, %v1108
    %v1143 = vadd.f32 %v929, %v1113
    %v1144 = vadd.f32 %v930, %v1118
    %v1145 = vadd.f32 %v931, %v1123
    %v1146 = vadd.f32 %v932, %v1128
    %s1147 = scalar_lea.vmem %s1, 28
    %v1148 = vld [vmem:[%s1147] sm:$0xf]
    %v1150 = vsel %vm85, %v684, 0
    %v1153 = vsel %vm85, %v718, 0
    %v1156 = vsel %vm134, %v1148, 0
    %1158 = vmatprep.subr.mxu0 0.0
    %1159 = vmatpush1.msra.mxu0 %v1156
    %1160 = vmatprep.subr.mxu0 0.0
    %1161 = vmatpush1.msra.mxu0 0.0
    %1162 = vmatprep.subr.mxu0 0.0
    %1163 = vmatpush1.msra.mxu0 0.0
    %1164 = vmatprep.subr.mxu0 0.0
    %1165 = vmatpush1.msra.mxu0 0.0
    %1166 = vmatprep.subr.mxu0 0.0
    %1167 = vmatpush1.msra.mxu0 0.0
    %1168 = vmatprep.subr.mxu0 0.0
    %1169 = vmatpush1.msra.mxu0 0.0
    %1170 = vmatprep.subr.mxu0 0.0
    %1171 = vmatpush1.msra.mxu0 0.0
    %1172 = vmatprep.subr.mxu0 0.0
    %1173 = vmatpush1.msra.mxu0 0.0
    %1174 = vmatprep.subr.mxu0 0.0
    %1175 = vmatpush1.msra.mxu0 0.0
    %1176 = vmatprep.subr.mxu0 0.0
    %1177 = vmatpush1.msra.mxu0 0.0
    %1178 = vmatprep.subr.mxu0 0.0
    %1179 = vmatpush1.msra.mxu0 0.0
    %1180 = vmatprep.subr.mxu0 0.0
    %1181 = vmatpush1.msra.mxu0 0.0
    %1182 = vmatprep.subr.mxu0 0.0
    %1183 = vmatpush1.msra.mxu0 0.0
    %1184 = vmatprep.subr.mxu0 0.0
    %1185 = vmatpush1.msra.mxu0 0.0
    %1186 = vmatprep.subr.mxu0 0.0
    %1187 = vmatpush1.msra.mxu0 0.0
    %1188 = vmatprep.subr.mxu0 0.0
    %1189 = vmatpush1.msra.mxu0 0.0
    %1190 = vmatprep.subr.mxu0 0.0
    %1191 = vmatpush1.msra.mxu0 0.0
    %1192 = vmatprep.subr.mxu0 0.0
    %1193 = vmatpush1.msra.mxu0 0.0
    %1194 = vmatprep.subr.mxu0 0.0
    %1195 = vmatpush1.msra.mxu0 0.0
    %1196 = vmatprep.subr.mxu0 0.0
    %1197 = vmatpush1.msra.mxu0 0.0
    %1198 = vmatprep.subr.mxu0 0.0
    %1199 = vmatpush1.msra.mxu0 0.0
    %1200 = vmatprep.subr.mxu0 0.0
    %1201 = vmatpush1.msra.mxu0 0.0
    %1202 = vmatprep.subr.mxu0 0.0
    %1203 = vmatpush1.msra.mxu0 0.0
    %1204 = vmatprep.subr.mxu0 0.0
    %1205 = vmatpush1.msra.mxu0 0.0
    %1206 = vmatprep.subr.mxu0 0.0
    %1207 = vmatpush1.msra.mxu0 0.0
    %1208 = vmatprep.subr.mxu0 0.0
    %1209 = vmatpush1.msra.mxu0 0.0
    %1210 = vmatprep.subr.mxu0 0.0
    %1211 = vmatpush1.msra.mxu0 0.0
    %1212 = vmatprep.subr.mxu0 0.0
    %1213 = vmatpush1.msra.mxu0 0.0
    %1214 = vmatprep.subr.mxu0 0.0
    %1215 = vmatpush1.msra.mxu0 0.0
    %1216 = vmatprep.subr.mxu0 0.0
    %1217 = vmatpush1.msra.mxu0 0.0
    %1218 = vmatprep.subr.mxu0 0.0
    %1219 = vmatpush1.msra.mxu0 0.0
    %1220 = vmatprep.subr.mxu0 0.0
    %1221 = vmatpush1.msra.mxu0 0.0
    %1222 = vmatprep.mubr.f32.mxu0 0.0
    %1223 = vmatmul.mubr.f32.gmra.mrb[0].mxu0 %v725
    %v1224 = vpop.f32.mrb[0].mxu0
    %v1225 = vadd.f32 0.0, %v1224
    %v1226 = vpop.f32.mrb[0].mxu0
    %1227 = vmatprep.mubr.f32.mxu0 0.0
    %1228 = vmatmul.mubr.f32.gmra.mrb[0].mxu0 %v728
    %v1229 = vpop.f32.mrb[0].mxu0
    %v1230 = vadd.f32 0.0, %v1229
    %v1231 = vpop.f32.mrb[0].mxu0
    %1232 = vmatprep.mubr.f32.mxu0 0.0
    %1233 = vmatmul.mubr.f32.gmra.mrb[0].mxu0 %v731
    %v1234 = vpop.f32.mrb[0].mxu0
    %v1235 = vadd.f32 0.0, %v1234
    %v1236 = vpop.f32.mrb[0].mxu0
    %1237 = vmatprep.mubr.f32.mxu0 0.0
    %1238 = vmatmul.mubr.f32.gmra.mrb[0].mxu0 %v734
    %v1239 = vpop.f32.mrb[0].mxu0
    %v1240 = vadd.f32 0.0, %v1239
    %v1241 = vpop.f32.mrb[0].mxu0
    %1242 = vmatprep.mubr.f32.mxu0 0.0
    %1243 = vmatmul.mubr.f32.gmra.mrb[0].mxu0 %v737
    %v1244 = vpop.f32.mrb[0].mxu0
    %v1245 = vadd.f32 0.0, %v1244
    %v1246 = vpop.f32.mrb[0].mxu0
    %1247 = vmatprep.mubr.f32.mxu0 0.0
    %1248 = vmatmul.mubr.f32.gmra.mrb[0].mxu0 %v740
    %v1249 = vpop.f32.mrb[0].mxu0
    %v1250 = vadd.f32 0.0, %v1249
    %v1251 = vpop.f32.mrb[0].mxu0
    %1252 = vmatprep.mubr.f32.mxu0 0.0
    %1253 = vmatmul.mubr.f32.gmra.mrb[0].mxu0 %v743
    %v1254 = vpop.f32.mrb[0].mxu0
    %v1255 = vadd.f32 0.0, %v1254
    %v1256 = vpop.f32.mrb[0].mxu0
    %1257 = vmatprep.mubr.f32.mxu0 0.0
    %1258 = vmatmul.mubr.f32.gmra.mrb[0].mxu0 %v1150
    %v1259 = vpop.f32.mrb[0].mxu0
    %v1260 = vadd.f32 0.0, %v1259
    %v1261 = vpop.f32.mrb[0].mxu0
    %1262 = vmatprep.mubr.f32.mxu0 0.0
    %1263 = vmatmul.mubr.f32.gmra.mrb[0].mxu0 %v749
    %v1264 = vpop.f32.mrb[0].mxu0
    %v1265 = vadd.f32 0.0, %v1264
    %v1266 = vpop.f32.mrb[0].mxu0
    %1267 = vmatprep.mubr.f32.mxu0 0.0
    %1268 = vmatmul.mubr.f32.gmra.mrb[0].mxu0 %v752
    %v1269 = vpop.f32.mrb[0].mxu0
    %v1270 = vadd.f32 0.0, %v1269
    %v1271 = vpop.f32.mrb[0].mxu0
    %1272 = vmatprep.mubr.f32.mxu0 0.0
    %1273 = vmatmul.mubr.f32.gmra.mrb[0].mxu0 %v755
    %v1274 = vpop.f32.mrb[0].mxu0
    %v1275 = vadd.f32 0.0, %v1274
    %v1276 = vpop.f32.mrb[0].mxu0
    %1277 = vmatprep.mubr.f32.mxu0 0.0
    %1278 = vmatmul.mubr.f32.gmra.mrb[0].mxu0 %v758
    %v1279 = vpop.f32.mrb[0].mxu0
    %v1280 = vadd.f32 0.0, %v1279
    %v1281 = vpop.f32.mrb[0].mxu0
    %1282 = vmatprep.mubr.f32.mxu0 0.0
    %1283 = vmatmul.mubr.f32.gmra.mrb[0].mxu0 %v761
    %v1284 = vpop.f32.mrb[0].mxu0
    %v1285 = vadd.f32 0.0, %v1284
    %v1286 = vpop.f32.mrb[0].mxu0
    %1287 = vmatprep.mubr.f32.mxu0 0.0
    %1288 = vmatmul.mubr.f32.gmra.mrb[0].mxu0 %v764
    %v1289 = vpop.f32.mrb[0].mxu0
    %v1290 = vadd.f32 0.0, %v1289
    %v1291 = vpop.f32.mrb[0].mxu0
    %1292 = vmatprep.mubr.f32.mxu0 0.0
    %1293 = vmatmul.mubr.f32.gmra.mrb[0].mxu0 %v767
    %v1294 = vpop.f32.mrb[0].mxu0
    %v1295 = vadd.f32 0.0, %v1294
    %v1296 = vpop.f32.mrb[0].mxu0
    %1297 = vmatprep.mubr.f32.mxu0 0.0
    %1298 = vmatmul.mubr.f32.gmra.mrb[0].mxu0 %v1153
    %v1299 = vpop.f32.mrb[0].mxu0
    %v1300 = vadd.f32 0.0, %v1299
    %v1301 = vpop.f32.mrb[0].mxu0
    %1302 = vdwg.mxu0
    %v1303 = vadd.f32 %v1131, %v1225
    %v1304 = vadd.f32 %v1132, %v1230
    %v1305 = vadd.f32 %v1133, %v1235
    %v1306 = vadd.f32 %v1134, %v1240
    %v1307 = vadd.f32 %v1135, %v1245
    %v1308 = vadd.f32 %v1136, %v1250
    %v1309 = vadd.f32 %v1137, %v1255
    %v1310 = vadd.f32 %v1138, %v1260
    %v1311 = vadd.f32 %v1139, %v1265
    %v1312 = vadd.f32 %v1140, %v1270
    %v1313 = vadd.f32 %v1141, %v1275
    %v1314 = vadd.f32 %v1142, %v1280
    %v1315 = vadd.f32 %v1143, %v1285
    %v1316 = vadd.f32 %v1144, %v1290
    %v1317 = vadd.f32 %v1145, %v1295
    %v1318 = vadd.f32 %v1146, %v1300
    %s1319 = scalar_lea.vmem %s0, 2
    %v1320 = vld [vmem:[%s1319] ss:$2 sm:$0xff]
    %s1321 = scalar_lea.vmem %s0, 26
    %v1322 = vld [vmem:[%s1321] ss:$2 sm:$0xff]
    %s1323 = scalar_lea.vmem %s0, 50
    %v1324 = vld [vmem:[%s1323] ss:$2 sm:$0xff]
    %s1325 = scalar_lea.vmem %s0, 74
    %v1326 = vld [vmem:[%s1325] ss:$2 sm:$0xff]
    %s1327 = scalar_lea.vmem %s0, 98
    %v1328 = vld [vmem:[%s1327] ss:$2 sm:$0xff]
    %s1329 = scalar_lea.vmem %s0, 122
    %v1330 = vld [vmem:[%s1329] ss:$2 sm:$0xff]
    %s1331 = scalar_lea.vmem %s0, 146
    %v1332 = vld [vmem:[%s1331] ss:$2 sm:$0xff]
    %s1333 = scalar_lea.vmem %s0, 170
    %v1334 = vld [vmem:[%s1333] ss:$2 sm:$0xff]
    %s1335 = scalar_lea.vmem %s0, 194
    %v1336 = vld [vmem:[%s1335] ss:$2 sm:$0xff]
    %s1337 = scalar_lea.vmem %s0, 218
    %v1338 = vld [vmem:[%s1337] ss:$2 sm:$0xff]
    %s1339 = scalar_lea.vmem %s0, 242
    %v1340 = vld [vmem:[%s1339] ss:$2 sm:$0xff]
    %s1341 = scalar_lea.vmem %s0, 266
    %v1342 = vld [vmem:[%s1341] ss:$2 sm:$0xff]
    %s1343 = scalar_lea.vmem %s0, 290
    %v1344 = vld [vmem:[%s1343] ss:$2 sm:$0xff]
    %s1345 = scalar_lea.vmem %s0, 314
    %v1346 = vld [vmem:[%s1345] ss:$2 sm:$0xff]
    %s1347 = scalar_lea.vmem %s0, 338
    %v1348 = vld [vmem:[%s1347] ss:$2 sm:$0xff]
    %s1349 = scalar_lea.vmem %s0, 362
    %v1350 = vld [vmem:[%s1349] ss:$2 sm:$0xff]
    %s1351 = scalar_lea.vmem %s0, 386
    %v1352 = vld [vmem:[%s1351] ss:$2 sm:$0xff]
    %s1353 = scalar_lea.vmem %s0, 434
    %v1354 = vld [vmem:[%s1353] ss:$2 sm:$0xff]
    %s1355 = scalar_lea.vmem %s0, 458
    %v1356 = vld [vmem:[%s1355] ss:$2 sm:$0xff]
    %s1357 = scalar_lea.vmem %s0, 482
    %v1358 = vld [vmem:[%s1357] ss:$2 sm:$0xff]
    %s1359 = scalar_lea.vmem %s0, 506
    %v1360 = vld [vmem:[%s1359] ss:$2 sm:$0xff]
    %s1361 = scalar_lea.vmem %s0, 530
    %v1362 = vld [vmem:[%s1361] ss:$2 sm:$0xff]
    %s1363 = scalar_lea.vmem %s0, 554
    %v1364 = vld [vmem:[%s1363] ss:$2 sm:$0xff]
    %s1365 = scalar_lea.vmem %s0, 578
    %v1366 = vld [vmem:[%s1365] ss:$2 sm:$0xff]
    %s1367 = scalar_lea.vmem %s0, 602
    %v1368 = vld [vmem:[%s1367] ss:$2 sm:$0xff]
    %s1369 = scalar_lea.vmem %s0, 626
    %v1370 = vld [vmem:[%s1369] ss:$2 sm:$0xff]
    %s1371 = scalar_lea.vmem %s0, 650
    %v1372 = vld [vmem:[%s1371] ss:$2 sm:$0xff]
    %s1373 = scalar_lea.vmem %s0, 674
    %v1374 = vld [vmem:[%s1373] ss:$2 sm:$0xff]
    %s1375 = scalar_lea.vmem %s0, 698
    %v1376 = vld [vmem:[%s1375] ss:$2 sm:$0xff]
    %s1377 = scalar_lea.vmem %s0, 722
    %v1378 = vld [vmem:[%s1377] ss:$2 sm:$0xff]
    %s1379 = scalar_lea.vmem %s0, 746
    %v1380 = vld [vmem:[%s1379] ss:$2 sm:$0xff]
    %s1381 = scalar_lea.vmem %s0, 770
    %v1382 = vld [vmem:[%s1381] ss:$2 sm:$0xff]
    %s1383 = scalar_lea.vmem %s0, 794
    %v1384 = vld [vmem:[%s1383] ss:$2 sm:$0xff]
    %s1385 = scalar_lea.vmem %s0, 818
    %v1386 = vld [vmem:[%s1385] ss:$2 sm:$0xff]
    %s1387 = scalar_lea.vmem %s1, 8
    %v1388 = vld [vmem:[%s1387] sm:$0xf]
    %v1390 = vsel %vm85, %v1320, 0
    %v1393 = vsel %vm85, %v1324, 0
    %v1396 = vsel %vm85, %v1328, 0
    %v1399 = vsel %vm85, %v1332, 0
    %v1402 = vsel %vm85, %v1336, 0
    %v1405 = vsel %vm85, %v1340, 0
    %v1408 = vsel %vm85, %v1344, 0
    %v1411 = vsel %vm85, %v1348, 0
    %v1414 = vsel %vm85, %v1354, 0
    %v1417 = vsel %vm85, %v1358, 0
    %v1420 = vsel %vm85, %v1362, 0
    %v1423 = vsel %vm85, %v1366, 0
    %v1426 = vsel %vm85, %v1370, 0
    %v1429 = vsel %vm85, %v1374, 0
    %v1432 = vsel %vm85, %v1378, 0
    %v1435 = vsel %vm85, %v1382, 0
    %v1438 = vsel %vm134, %v1388, 0
    %1440 = vmatprep.subr.mxu0 0.0
    %1441 = vmatpush1.msra.mxu0 %v1438
    %1442 = vmatprep.subr.mxu0 0.0
    %1443 = vmatpush1.msra.mxu0 0.0
    %1444 = vmatprep.subr.mxu0 0.0
    %1445 = vmatpush1.msra.mxu0 0.0
    %1446 = vmatprep.subr.mxu0 0.0
    %1447 = vmatpush1.msra.mxu0 0.0
    %1448 = vmatprep.subr.mxu0 0.0
    %1449 = vmatpush1.msra.mxu0 0.0
    %1450 = vmatprep.subr.mxu0 0.0
    %1451 = vmatpush1.msra.mxu0 0.0
    %1452 = vmatprep.subr.mxu0 0.0
    %1453 = vmatpush1.msra.mxu0 0.0
    %1454 = vmatprep.subr.mxu0 0.0
    %1455 = vmatpush1.msra.mxu0 0.0
    %1456 = vmatprep.subr.mxu0 0.0
    %1457 = vmatpush1.msra.mxu0 0.0
    %1458 = vmatprep.subr.mxu0 0.0
    %1459 = vmatpush1.msra.mxu0 0.0
    %1460 = vmatprep.subr.mxu0 0.0
    %1461 = vmatpush1.msra.mxu0 0.0
    %1462 = vmatprep.subr.mxu0 0.0
    %1463 = vmatpush1.msra.mxu0 0.0
    %1464 = vmatprep.subr.mxu0 0.0
    %1465 = vmatpush1.msra.mxu0 0.0
    %1466 = vmatprep.subr.mxu0 0.0
    %1467 = vmatpush1.msra.mxu0 0.0
    %1468 = vmatprep.subr.mxu0 0.0
    %1469 = vmatpush1.msra.mxu0 0.0
    %1470 = vmatprep.subr.mxu0 0.0
    %1471 = vmatpush1.msra.mxu0 0.0
    %1472 = vmatprep.subr.mxu0 0.0
    %1473 = vmatpush1.msra.mxu0 0.0
    %1474 = vmatprep.subr.mxu0 0.0
    %1475 = vmatpush1.msra.mxu0 0.0
    %1476 = vmatprep.subr.mxu0 0.0
    %1477 = vmatpush1.msra.mxu0 0.0
    %1478 = vmatprep.subr.mxu0 0.0
    %1479 = vmatpush1.msra.mxu0 0.0
    %1480 = vmatprep.subr.mxu0 0.0
    %1481 = vmatpush1.msra.mxu0 0.0
    %1482 = vmatprep.subr.mxu0 0.0
    %1483 = vmatpush1.msra.mxu0 0.0
    %1484 = vmatprep.subr.mxu0 0.0
    %1485 = vmatpush1.msra.mxu0 0.0
    %1486 = vmatprep.subr.mxu0 0.0
    %1487 = vmatpush1.msra.mxu0 0.0
    %1488 = vmatprep.subr.mxu0 0.0
    %1489 = vmatpush1.msra.mxu0 0.0
    %1490 = vmatprep.subr.mxu0 0.0
    %1491 = vmatpush1.msra.mxu0 0.0
    %1492 = vmatprep.subr.mxu0 0.0
    %1493 = vmatpush1.msra.mxu0 0.0
    %1494 = vmatprep.subr.mxu0 0.0
    %1495 = vmatpush1.msra.mxu0 0.0
    %1496 = vmatprep.subr.mxu0 0.0
    %1497 = vmatpush1.msra.mxu0 0.0
    %1498 = vmatprep.subr.mxu0 0.0
    %1499 = vmatpush1.msra.mxu0 0.0
    %1500 = vmatprep.subr.mxu0 0.0
    %1501 = vmatpush1.msra.mxu0 0.0
    %1502 = vmatprep.subr.mxu0 0.0
    %1503 = vmatpush1.msra.mxu0 0.0
    %1504 = vmatprep.mubr.f32.mxu0 0.0
    %1505 = vmatmul.mubr.f32.gmra.mrb[0].mxu0 %v1390
    %v1506 = vpop.f32.mrb[0].mxu0
    %v1507 = vadd.f32 0.0, %v1506
    %v1508 = vpop.f32.mrb[0].mxu0
    %1509 = vmatprep.mubr.f32.mxu0 0.0
    %1510 = vmatmul.mubr.f32.gmra.mrb[0].mxu0 %v1393
    %v1511 = vpop.f32.mrb[0].mxu0
    %v1512 = vadd.f32 0.0, %v1511
    %v1513 = vpop.f32.mrb[0].mxu0
    %1514 = vmatprep.mubr.f32.mxu0 0.0
    %1515 = vmatmul.mubr.f32.gmra.mrb[0].mxu0 %v1396
    %v1516 = vpop.f32.mrb[0].mxu0
    %v1517 = vadd.f32 0.0, %v1516
    %v1518 = vpop.f32.mrb[0].mxu0
    %1519 = vmatprep.mubr.f32.mxu0 0.0
    %1520 = vmatmul.mubr.f32.gmra.mrb[0].mxu0 %v1399
    %v1521 = vpop.f32.mrb[0].mxu0
    %v1522 = vadd.f32 0.0, %v1521
    %v1523 = vpop.f32.mrb[0].mxu0
    %1524 = vmatprep.mubr.f32.mxu0 0.0
    %1525 = vmatmul.mubr.f32.gmra.mrb[0].mxu0 %v1402
    %v1526 = vpop.f32.mrb[0].mxu0
    %v1527 = vadd.f32 0.0, %v1526
    %v1528 = vpop.f32.mrb[0].mxu0
    %1529 = vmatprep.mubr.f32.mxu0 0.0
    %1530 = vmatmul.mubr.f32.gmra.mrb[0].mxu0 %v1405
    %v1531 = vpop.f32.mrb[0].mxu0
    %v1532 = vadd.f32 0.0, %v1531
    %v1533 = vpop.f32.mrb[0].mxu0
    %1534 = vmatprep.mubr.f32.mxu0 0.0
    %1535 = vmatmul.mubr.f32.gmra.mrb[0].mxu0 %v1408
    %v1536 = vpop.f32.mrb[0].mxu0
    %v1537 = vadd.f32 0.0, %v1536
    %v1538 = vpop.f32.mrb[0].mxu0
    %1539 = vmatprep.mubr.f32.mxu0 0.0
    %1540 = vmatmul.mubr.f32.gmra.mrb[0].mxu0 %v1411
    %v1541 = vpop.f32.mrb[0].mxu0
    %v1542 = vadd.f32 0.0, %v1541
    %v1543 = vpop.f32.mrb[0].mxu0
    %1544 = vmatprep.mubr.f32.mxu0 0.0
    %1545 = vmatmul.mubr.f32.gmra.mrb[0].mxu0 %v1414
    %v1546 = vpop.f32.mrb[0].mxu0
    %v1547 = vadd.f32 0.0, %v1546
    %v1548 = vpop.f32.mrb[0].mxu0
    %1549 = vmatprep.mubr.f32.mxu0 0.0
    %1550 = vmatmul.mubr.f32.gmra.mrb[0].mxu0 %v1417
    %v1551 = vpop.f32.mrb[0].mxu0
    %v1552 = vadd.f32 0.0, %v1551
    %v1553 = vpop.f32.mrb[0].mxu0
    %1554 = vmatprep.mubr.f32.mxu0 0.0
    %1555 = vmatmul.mubr.f32.gmra.mrb[0].mxu0 %v1420
    %v1556 = vpop.f32.mrb[0].mxu0
    %v1557 = vadd.f32 0.0, %v1556
    %v1558 = vpop.f32.mrb[0].mxu0
    %1559 = vmatprep.mubr.f32.mxu0 0.0
    %1560 = vmatmul.mubr.f32.gmra.mrb[0].mxu0 %v1423
    %v1561 = vpop.f32.mrb[0].mxu0
    %v1562 = vadd.f32 0.0, %v1561
    %v1563 = vpop.f32.mrb[0].mxu0
    %1564 = vmatprep.mubr.f32.mxu0 0.0
    %1565 = vmatmul.mubr.f32.gmra.mrb[0].mxu0 %v1426
    %v1566 = vpop.f32.mrb[0].mxu0
    %v1567 = vadd.f32 0.0, %v1566
    %v1568 = vpop.f32.mrb[0].mxu0
    %1569 = vmatprep.mubr.f32.mxu0 0.0
    %1570 = vmatmul.mubr.f32.gmra.mrb[0].mxu0 %v1429
    %v1571 = vpop.f32.mrb[0].mxu0
    %v1572 = vadd.f32 0.0, %v1571
    %v1573 = vpop.f32.mrb[0].mxu0
    %1574 = vmatprep.mubr.f32.mxu0 0.0
    %1575 = vmatmul.mubr.f32.gmra.mrb[0].mxu0 %v1432
    %v1576 = vpop.f32.mrb[0].mxu0
    %v1577 = vadd.f32 0.0, %v1576
    %v1578 = vpop.f32.mrb[0].mxu0
    %1579 = vmatprep.mubr.f32.mxu0 0.0
    %1580 = vmatmul.mubr.f32.gmra.mrb[0].mxu0 %v1435
    %v1581 = vpop.f32.mrb[0].mxu0
    %v1582 = vadd.f32 0.0, %v1581
    %v1583 = vpop.f32.mrb[0].mxu0
    %1584 = vdwg.mxu0
    %v1585 = vadd.f32 %v1303, %v1507
    %v1586 = vadd.f32 %v1304, %v1512
    %v1587 = vadd.f32 %v1305, %v1517
    %v1588 = vadd.f32 %v1306, %v1522
    %v1589 = vadd.f32 %v1307, %v1527
    %v1590 = vadd.f32 %v1308, %v1532
    %v1591 = vadd.f32 %v1309, %v1537
    %v1592 = vadd.f32 %v1310, %v1542
    %v1593 = vadd.f32 %v1311, %v1547
    %v1594 = vadd.f32 %v1312, %v1552
    %v1595 = vadd.f32 %v1313, %v1557
    %v1596 = vadd.f32 %v1314, %v1562
    %v1597 = vadd.f32 %v1315, %v1567
    %v1598 = vadd.f32 %v1316, %v1572
    %v1599 = vadd.f32 %v1317, %v1577
    %v1600 = vadd.f32 %v1318, %v1582
    %s1601 = scalar_lea.vmem %s1, 20
    %v1602 = vld [vmem:[%s1601] sm:$0xf]
    %v1604 = vsel %vm85, %v1322, 0
    %v1607 = vsel %vm85, %v1326, 0
    %v1610 = vsel %vm85, %v1330, 0
    %v1613 = vsel %vm85, %v1334, 0
    %v1616 = vsel %vm85, %v1338, 0
    %v1619 = vsel %vm85, %v1342, 0
    %v1622 = vsel %vm85, %v1346, 0
    %v1625 = vsel %vm85, %v1350, 0
    %v1628 = vsel %vm85, %v1356, 0
    %v1631 = vsel %vm85, %v1360, 0
    %v1634 = vsel %vm85, %v1364, 0
    %v1637 = vsel %vm85, %v1368, 0
    %v1640 = vsel %vm85, %v1372, 0
    %v1643 = vsel %vm85, %v1376, 0
    %v1646 = vsel %vm85, %v1380, 0
    %v1649 = vsel %vm85, %v1384, 0
    %v1652 = vsel %vm134, %v1602, 0
    %1654 = vmatprep.subr.mxu0 0.0
    %1655 = vmatpush1.msra.mxu0 %v1652
    %1656 = vmatprep.subr.mxu0 0.0
    %1657 = vmatpush1.msra.mxu0 0.0
    %1658 = vmatprep.subr.mxu0 0.0
    %1659 = vmatpush1.msra.mxu0 0.0
    %1660 = vmatprep.subr.mxu0 0.0
    %1661 = vmatpush1.msra.mxu0 0.0
    %1662 = vmatprep.subr.mxu0 0.0
    %1663 = vmatpush1.msra.mxu0 0.0
    %1664 = vmatprep.subr.mxu0 0.0
    %1665 = vmatpush1.msra.mxu0 0.0
    %1666 = vmatprep.subr.mxu0 0.0
    %1667 = vmatpush1.msra.mxu0 0.0
    %1668 = vmatprep.subr.mxu0 0.0
    %1669 = vmatpush1.msra.mxu0 0.0
    %1670 = vmatprep.subr.mxu0 0.0
    %1671 = vmatpush1.msra.mxu0 0.0
    %1672 = vmatprep.subr.mxu0 0.0
    %1673 = vmatpush1.msra.mxu0 0.0
    %1674 = vmatprep.subr.mxu0 0.0
    %1675 = vmatpush1.msra.mxu0 0.0
    %1676 = vmatprep.subr.mxu0 0.0
    %1677 = vmatpush1.msra.mxu0 0.0
    %1678 = vmatprep.subr.mxu0 0.0
    %1679 = vmatpush1.msra.mxu0 0.0
    %1680 = vmatprep.subr.mxu0 0.0
    %1681 = vmatpush1.msra.mxu0 0.0
    %1682 = vmatprep.subr.mxu0 0.0
    %1683 = vmatpush1.msra.mxu0 0.0
    %1684 = vmatprep.subr.mxu0 0.0
    %1685 = vmatpush1.msra.mxu0 0.0
    %1686 = vmatprep.subr.mxu0 0.0
    %1687 = vmatpush1.msra.mxu0 0.0
    %1688 = vmatprep.subr.mxu0 0.0
    %1689 = vmatpush1.msra.mxu0 0.0
    %1690 = vmatprep.subr.mxu0 0.0
    %1691 = vmatpush1.msra.mxu0 0.0
    %1692 = vmatprep.subr.mxu0 0.0
    %1693 = vmatpush1.msra.mxu0 0.0
    %1694 = vmatprep.subr.mxu0 0.0
    %1695 = vmatpush1.msra.mxu0 0.0
    %1696 = vmatprep.subr.mxu0 0.0
    %1697 = vmatpush1.msra.mxu0 0.0
    %1698 = vmatprep.subr.mxu0 0.0
    %1699 = vmatpush1.msra.mxu0 0.0
    %1700 = vmatprep.subr.mxu0 0.0
    %1701 = vmatpush1.msra.mxu0 0.0
    %1702 = vmatprep.subr.mxu0 0.0
    %1703 = vmatpush1.msra.mxu0 0.0
    %1704 = vmatprep.subr.mxu0 0.0
    %1705 = vmatpush1.msra.mxu0 0.0
    %1706 = vmatprep.subr.mxu0 0.0
    %1707 = vmatpush1.msra.mxu0 0.0
    %1708 = vmatprep.subr.mxu0 0.0
    %1709 = vmatpush1.msra.mxu0 0.0
    %1710 = vmatprep.subr.mxu0 0.0
    %1711 = vmatpush1.msra.mxu0 0.0
    %1712 = vmatprep.subr.mxu0 0.0
    %1713 = vmatpush1.msra.mxu0 0.0
    %1714 = vmatprep.subr.mxu0 0.0
    %1715 = vmatpush1.msra.mxu0 0.0
    %1716 = vmatprep.subr.mxu0 0.0
    %1717 = vmatpush1.msra.mxu0 0.0
    %1718 = vmatprep.mubr.f32.mxu0 0.0
    %1719 = vmatmul.mubr.f32.gmra.mrb[0].mxu0 %v1604
    %v1720 = vpop.f32.mrb[0].mxu0
    %v1721 = vadd.f32 0.0, %v1720
    %v1722 = vpop.f32.mrb[0].mxu0
    %1723 = vmatprep.mubr.f32.mxu0 0.0
    %1724 = vmatmul.mubr.f32.gmra.mrb[0].mxu0 %v1607
    %v1725 = vpop.f32.mrb[0].mxu0
    %v1726 = vadd.f32 0.0, %v1725
    %v1727 = vpop.f32.mrb[0].mxu0
    %1728 = vmatprep.mubr.f32.mxu0 0.0
    %1729 = vmatmul.mubr.f32.gmra.mrb[0].mxu0 %v1610
    %v1730 = vpop.f32.mrb[0].mxu0
    %v1731 = vadd.f32 0.0, %v1730
    %v1732 = vpop.f32.mrb[0].mxu0
    %1733 = vmatprep.mubr.f32.mxu0 0.0
    %1734 = vmatmul.mubr.f32.gmra.mrb[0].mxu0 %v1613
    %v1735 = vpop.f32.mrb[0].mxu0
    %v1736 = vadd.f32 0.0, %v1735
    %v1737 = vpop.f32.mrb[0].mxu0
    %1738 = vmatprep.mubr.f32.mxu0 0.0
    %1739 = vmatmul.mubr.f32.gmra.mrb[0].mxu0 %v1616
    %v1740 = vpop.f32.mrb[0].mxu0
    %v1741 = vadd.f32 0.0, %v1740
    %v1742 = vpop.f32.mrb[0].mxu0
    %1743 = vmatprep.mubr.f32.mxu0 0.0
    %1744 = vmatmul.mubr.f32.gmra.mrb[0].mxu0 %v1619
    %v1745 = vpop.f32.mrb[0].mxu0
    %v1746 = vadd.f32 0.0, %v1745
    %v1747 = vpop.f32.mrb[0].mxu0
    %1748 = vmatprep.mubr.f32.mxu0 0.0
    %1749 = vmatmul.mubr.f32.gmra.mrb[0].mxu0 %v1622
    %v1750 = vpop.f32.mrb[0].mxu0
    %v1751 = vadd.f32 0.0, %v1750
    %v1752 = vpop.f32.mrb[0].mxu0
    %1753 = vmatprep.mubr.f32.mxu0 0.0
    %1754 = vmatmul.mubr.f32.gmra.mrb[0].mxu0 %v1625
    %v1755 = vpop.f32.mrb[0].mxu0
    %v1756 = vadd.f32 0.0, %v1755
    %v1757 = vpop.f32.mrb[0].mxu0
    %1758 = vmatprep.mubr.f32.mxu0 0.0
    %1759 = vmatmul.mubr.f32.gmra.mrb[0].mxu0 %v1628
    %v1760 = vpop.f32.mrb[0].mxu0
    %v1761 = vadd.f32 0.0, %v1760
    %v1762 = vpop.f32.mrb[0].mxu0
    %1763 = vmatprep.mubr.f32.mxu0 0.0
    %1764 = vmatmul.mubr.f32.gmra.mrb[0].mxu0 %v1631
    %v1765 = vpop.f32.mrb[0].mxu0
    %v1766 = vadd.f32 0.0, %v1765
    %v1767 = vpop.f32.mrb[0].mxu0
    %1768 = vmatprep.mubr.f32.mxu0 0.0
    %1769 = vmatmul.mubr.f32.gmra.mrb[0].mxu0 %v1634
    %v1770 = vpop.f32.mrb[0].mxu0
    %v1771 = vadd.f32 0.0, %v1770
    %v1772 = vpop.f32.mrb[0].mxu0
    %1773 = vmatprep.mubr.f32.mxu0 0.0
    %1774 = vmatmul.mubr.f32.gmra.mrb[0].mxu0 %v1637
    %v1775 = vpop.f32.mrb[0].mxu0
    %v1776 = vadd.f32 0.0, %v1775
    %v1777 = vpop.f32.mrb[0].mxu0
    %1778 = vmatprep.mubr.f32.mxu0 0.0
    %1779 = vmatmul.mubr.f32.gmra.mrb[0].mxu0 %v1640
    %v1780 = vpop.f32.mrb[0].mxu0
    %v1781 = vadd.f32 0.0, %v1780
    %v1782 = vpop.f32.mrb[0].mxu0
    %1783 = vmatprep.mubr.f32.mxu0 0.0
    %1784 = vmatmul.mubr.f32.gmra.mrb[0].mxu0 %v1643
    %v1785 = vpop.f32.mrb[0].mxu0
    %v1786 = vadd.f32 0.0, %v1785
    %v1787 = vpop.f32.mrb[0].mxu0
    %1788 = vmatprep.mubr.f32.mxu0 0.0
    %1789 = vmatmul.mubr.f32.gmra.mrb[0].mxu0 %v1646
    %v1790 = vpop.f32.mrb[0].mxu0
    %v1791 = vadd.f32 0.0, %v1790
    %v1792 = vpop.f32.mrb[0].mxu0
    %1793 = vmatprep.mubr.f32.mxu0 0.0
    %1794 = vmatmul.mubr.f32.gmra.mrb[0].mxu0 %v1649
    %v1795 = vpop.f32.mrb[0].mxu0
    %v1796 = vadd.f32 0.0, %v1795
    %v1797 = vpop.f32.mrb[0].mxu0
    %1798 = vdwg.mxu0
    %v1799 = vadd.f32 %v1585, %v1721
    %v1800 = vadd.f32 %v1586, %v1726
    %v1801 = vadd.f32 %v1587, %v1731
    %v1802 = vadd.f32 %v1588, %v1736
    %v1803 = vadd.f32 %v1589, %v1741
    %v1804 = vadd.f32 %v1590, %v1746
    %v1805 = vadd.f32 %v1591, %v1751
    %v1806 = vadd.f32 %v1592, %v1756
    %v1807 = vadd.f32 %v1593, %v1761
    %v1808 = vadd.f32 %v1594, %v1766
    %v1809 = vadd.f32 %v1595, %v1771
    %v1810 = vadd.f32 %v1596, %v1776
    %v1811 = vadd.f32 %v1597, %v1781
    %v1812 = vadd.f32 %v1598, %v1786
    %v1813 = vadd.f32 %v1599, %v1791
    %v1814 = vadd.f32 %v1600, %v1796
    %s1815 = scalar_lea.vmem %s1, 32
    %v1816 = vld [vmem:[%s1815] sm:$0xf]
    %v1818 = vsel %vm85, %v1352, 0
    %v1821 = vsel %vm85, %v1386, 0
    %v1824 = vsel %vm134, %v1816, 0
    %1826 = vmatprep.subr.mxu0 0.0
    %1827 = vmatpush1.msra.mxu0 %v1824
    %1828 = vmatprep.subr.mxu0 0.0
    %1829 = vmatpush1.msra.mxu0 0.0
    %1830 = vmatprep.subr.mxu0 0.0
    %1831 = vmatpush1.msra.mxu0 0.0
    %1832 = vmatprep.subr.mxu0 0.0
    %1833 = vmatpush1.msra.mxu0 0.0
    %1834 = vmatprep.subr.mxu0 0.0
    %1835 = vmatpush1.msra.mxu0 0.0
    %1836 = vmatprep.subr.mxu0 0.0
    %1837 = vmatpush1.msra.mxu0 0.0
    %1838 = vmatprep.subr.mxu0 0.0
    %1839 = vmatpush1.msra.mxu0 0.0
    %1840 = vmatprep.subr.mxu0 0.0
    %1841 = vmatpush1.msra.mxu0 0.0
    %1842 = vmatprep.subr.mxu0 0.0
    %1843 = vmatpush1.msra.mxu0 0.0
    %1844 = vmatprep.subr.mxu0 0.0
    %1845 = vmatpush1.msra.mxu0 0.0
    %1846 = vmatprep.subr.mxu0 0.0
    %1847 = vmatpush1.msra.mxu0 0.0
    %1848 = vmatprep.subr.mxu0 0.0
    %1849 = vmatpush1.msra.mxu0 0.0
    %1850 = vmatprep.subr.mxu0 0.0
    %1851 = vmatpush1.msra.mxu0 0.0
    %1852 = vmatprep.subr.mxu0 0.0
    %1853 = vmatpush1.msra.mxu0 0.0
    %1854 = vmatprep.subr.mxu0 0.0
    %1855 = vmatpush1.msra.mxu0 0.0
    %1856 = vmatprep.subr.mxu0 0.0
    %1857 = vmatpush1.msra.mxu0 0.0
    %1858 = vmatprep.subr.mxu0 0.0
    %1859 = vmatpush1.msra.mxu0 0.0
    %1860 = vmatprep.subr.mxu0 0.0
    %1861 = vmatpush1.msra.mxu0 0.0
    %1862 = vmatprep.subr.mxu0 0.0
    %1863 = vmatpush1.msra.mxu0 0.0
    %1864 = vmatprep.subr.mxu0 0.0
    %1865 = vmatpush1.msra.mxu0 0.0
    %1866 = vmatprep.subr.mxu0 0.0
    %1867 = vmatpush1.msra.mxu0 0.0
    %1868 = vmatprep.subr.mxu0 0.0
    %1869 = vmatpush1.msra.mxu0 0.0
    %1870 = vmatprep.subr.mxu0 0.0
    %1871 = vmatpush1.msra.mxu0 0.0
    %1872 = vmatprep.subr.mxu0 0.0
    %1873 = vmatpush1.msra.mxu0 0.0
    %1874 = vmatprep.subr.mxu0 0.0
    %1875 = vmatpush1.msra.mxu0 0.0
    %1876 = vmatprep.subr.mxu0 0.0
    %1877 = vmatpush1.msra.mxu0 0.0
    %1878 = vmatprep.subr.mxu0 0.0
    %1879 = vmatpush1.msra.mxu0 0.0
    %1880 = vmatprep.subr.mxu0 0.0
    %1881 = vmatpush1.msra.mxu0 0.0
    %1882 = vmatprep.subr.mxu0 0.0
    %1883 = vmatpush1.msra.mxu0 0.0
    %1884 = vmatprep.subr.mxu0 0.0
    %1885 = vmatpush1.msra.mxu0 0.0
    %1886 = vmatprep.subr.mxu0 0.0
    %1887 = vmatpush1.msra.mxu0 0.0
    %1888 = vmatprep.subr.mxu0 0.0
    %1889 = vmatpush1.msra.mxu0 0.0
    %1890 = vmatprep.mubr.f32.mxu0 0.0
    %1891 = vmatmul.mubr.f32.gmra.mrb[0].mxu0 %v1393
    %v1892 = vpop.f32.mrb[0].mxu0
    %v1893 = vadd.f32 0.0, %v1892
    %v1894 = vpop.f32.mrb[0].mxu0
    %1895 = vmatprep.mubr.f32.mxu0 0.0
    %1896 = vmatmul.mubr.f32.gmra.mrb[0].mxu0 %v1396
    %v1897 = vpop.f32.mrb[0].mxu0
    %v1898 = vadd.f32 0.0, %v1897
    %v1899 = vpop.f32.mrb[0].mxu0
    %1900 = vmatprep.mubr.f32.mxu0 0.0
    %1901 = vmatmul.mubr.f32.gmra.mrb[0].mxu0 %v1399
    %v1902 = vpop.f32.mrb[0].mxu0
    %v1903 = vadd.f32 0.0, %v1902
    %v1904 = vpop.f32.mrb[0].mxu0
    %1905 = vmatprep.mubr.f32.mxu0 0.0
    %1906 = vmatmul.mubr.f32.gmra.mrb[0].mxu0 %v1402
    %v1907 = vpop.f32.mrb[0].mxu0
    %v1908 = vadd.f32 0.0, %v1907
    %v1909 = vpop.f32.mrb[0].mxu0
    %1910 = vmatprep.mubr.f32.mxu0 0.0
    %1911 = vmatmul.mubr.f32.gmra.mrb[0].mxu0 %v1405
    %v1912 = vpop.f32.mrb[0].mxu0
    %v1913 = vadd.f32 0.0, %v1912
    %v1914 = vpop.f32.mrb[0].mxu0
    %1915 = vmatprep.mubr.f32.mxu0 0.0
    %1916 = vmatmul.mubr.f32.gmra.mrb[0].mxu0 %v1408
    %v1917 = vpop.f32.mrb[0].mxu0
    %v1918 = vadd.f32 0.0, %v1917
    %v1919 = vpop.f32.mrb[0].mxu0
    %1920 = vmatprep.mubr.f32.mxu0 0.0
    %1921 = vmatmul.mubr.f32.gmra.mrb[0].mxu0 %v1411
    %v1922 = vpop.f32.mrb[0].mxu0
    %v1923 = vadd.f32 0.0, %v1922
    %v1924 = vpop.f32.mrb[0].mxu0
    %1925 = vmatprep.mubr.f32.mxu0 0.0
    %1926 = vmatmul.mubr.f32.gmra.mrb[0].mxu0 %v1818
    %v1927 = vpop.f32.mrb[0].mxu0
    %v1928 = vadd.f32 0.0, %v1927
    %v1929 = vpop.f32.mrb[0].mxu0
    %1930 = vmatprep.mubr.f32.mxu0 0.0
    %1931 = vmatmul.mubr.f32.gmra.mrb[0].mxu0 %v1417
    %v1932 = vpop.f32.mrb[0].mxu0
    %v1933 = vadd.f32 0.0, %v1932
    %v1934 = vpop.f32.mrb[0].mxu0
    %1935 = vmatprep.mubr.f32.mxu0 0.0
    %1936 = vmatmul.mubr.f32.gmra.mrb[0].mxu0 %v1420
    %v1937 = vpop.f32.mrb[0].mxu0
    %v1938 = vadd.f32 0.0, %v1937
    %v1939 = vpop.f32.mrb[0].mxu0
    %1940 = vmatprep.mubr.f32.mxu0 0.0
    %1941 = vmatmul.mubr.f32.gmra.mrb[0].mxu0 %v1423
    %v1942 = vpop.f32.mrb[0].mxu0
    %v1943 = vadd.f32 0.0, %v1942
    %v1944 = vpop.f32.mrb[0].mxu0
    %1945 = vmatprep.mubr.f32.mxu0 0.0
    %1946 = vmatmul.mubr.f32.gmra.mrb[0].mxu0 %v1426
    %v1947 = vpop.f32.mrb[0].mxu0
    %v1948 = vadd.f32 0.0, %v1947
    %v1949 = vpop.f32.mrb[0].mxu0
    %1950 = vmatprep.mubr.f32.mxu0 0.0
    %1951 = vmatmul.mubr.f32.gmra.mrb[0].mxu0 %v1429
    %v1952 = vpop.f32.mrb[0].mxu0
    %v1953 = vadd.f32 0.0, %v1952
    %v1954 = vpop.f32.mrb[0].mxu0
    %1955 = vmatprep.mubr.f32.mxu0 0.0
    %1956 = vmatmul.mubr.f32.gmra.mrb[0].mxu0 %v1432
    %v1957 = vpop.f32.mrb[0].mxu0
    %v1958 = vadd.f32 0.0, %v1957
    %v1959 = vpop.f32.mrb[0].mxu0
    %1960 = vmatprep.mubr.f32.mxu0 0.0
    %1961 = vmatmul.mubr.f32.gmra.mrb[0].mxu0 %v1435
    %v1962 = vpop.f32.mrb[0].mxu0
    %v1963 = vadd.f32 0.0, %v1962
    %v1964 = vpop.f32.mrb[0].mxu0
    %1965 = vmatprep.mubr.f32.mxu0 0.0
    %1966 = vmatmul.mubr.f32.gmra.mrb[0].mxu0 %v1821
    %v1967 = vpop.f32.mrb[0].mxu0
    %v1968 = vadd.f32 0.0, %v1967
    %v1969 = vpop.f32.mrb[0].mxu0
    %1970 = vdwg.mxu0
    %v1971 = vadd.f32 %v1799, %v1893
    %v1972 = vadd.f32 %v1800, %v1898
    %v1973 = vadd.f32 %v1801, %v1903
    %v1974 = vadd.f32 %v1802, %v1908
    %v1975 = vadd.f32 %v1803, %v1913
    %v1976 = vadd.f32 %v1804, %v1918
    %v1977 = vadd.f32 %v1805, %v1923
    %v1978 = vadd.f32 %v1806, %v1928
    %v1979 = vadd.f32 %v1807, %v1933
    %v1980 = vadd.f32 %v1808, %v1938
    %v1981 = vadd.f32 %v1809, %v1943
    %v1982 = vadd.f32 %v1810, %v1948
    %v1983 = vadd.f32 %v1811, %v1953
    %v1984 = vadd.f32 %v1812, %v1958
    %v1985 = vadd.f32 %v1813, %v1963
    %v1986 = vadd.f32 %v1814, %v1968
    %v1987 = vld [vmem:[%s2] sm:$0x1]
    %v1989 = vlaneseq
    %v1990 = vshrl.u32 %v1989, 7
    %v1991 = vsub.s32 0, %v1990
    %v1992 = vrot.slane %v1987, %v1991
    %v1994 = vadd.f32 %v1971, %v1992
    %v1995 = vadd.f32 %v1972, %v1992
    %v1996 = vadd.f32 %v1973, %v1992
    %v1997 = vadd.f32 %v1974, %v1992
    %v1998 = vadd.f32 %v1975, %v1992
    %v1999 = vadd.f32 %v1976, %v1992
    %v2000 = vadd.f32 %v1977, %v1992
    %v2001 = vadd.f32 %v1978, %v1992
    %v2002 = vadd.f32 %v1979, %v1992
    %v2003 = vadd.f32 %v1980, %v1992
    %v2004 = vadd.f32 %v1981, %v1992
    %v2005 = vadd.f32 %v1982, %v1992
    %v2006 = vadd.f32 %v1983, %v1992
    %v2007 = vadd.f32 %v1984, %v1992
    %v2008 = vadd.f32 %v1985, %v1992
    %v2009 = vadd.f32 %v1986, %v1992
    %v2010 = vmax.f32 %v1994, 0.0
    %v2011 = vmax.f32 %v1995, 0.0
    %v2012 = vmax.f32 %v1996, 0.0
    %v2013 = vmax.f32 %v1997, 0.0
    %v2014 = vmax.f32 %v1998, 0.0
    %v2015 = vmax.f32 %v1999, 0.0
    %v2016 = vmax.f32 %v2000, 0.0
    %v2017 = vmax.f32 %v2001, 0.0
    %v2018 = vmax.f32 %v2002, 0.0
    %v2019 = vmax.f32 %v2003, 0.0
    %v2020 = vmax.f32 %v2004, 0.0
    %v2021 = vmax.f32 %v2005, 0.0
    %v2022 = vmax.f32 %v2006, 0.0
    %v2023 = vmax.f32 %v2007, 0.0
    %v2024 = vmax.f32 %v2008, 0.0
    %v2025 = vmax.f32 %v2009, 0.0
    %2026 = vst [vmem:[#allocation2] sm:$0xff] 0.0
    %2027 = vst [vmem:[#allocation2 + $0x8] sm:$0xff] 0.0
    %2028 = vst [vmem:[#allocation2 + $0xa0] sm:$0xff] 0.0
    %2029 = vst [vmem:[#allocation2 + $0xa8] sm:$0xff] 0.0
    %s2030 = scalar_lea.vmem [#allocation2], 144
    %2031 = vst [vmem:[%s2030] sm:$0xff] 0.0
    %2032 = vst [vmem:[%s2030 + $0x8] sm:$0xff] 0.0
    %2033 = vst [vmem:[%s2030 + $0xa0] sm:$0xff] 0.0
    %2034 = vst [vmem:[%s2030 + $0xa8] sm:$0xff] 0.0
    %2035 = vst [vmem:[#allocation2] sm:$0xff] 0.0
    %2036 = vst [vmem:[#allocation2 + $0x10] sm:$0xff] 0.0
    %2037 = vst [vmem:[#allocation2 + $0x20] sm:$0xff] 0.0
    %2038 = vst [vmem:[#allocation2 + $0x30] sm:$0xff] 0.0
    %2039 = vst [vmem:[#allocation2 + $0x40] sm:$0xff] 0.0
    %2040 = vst [vmem:[#allocation2 + $0x50] sm:$0xff] 0.0
    %2041 = vst [vmem:[#allocation2 + $0x60] sm:$0xff] 0.0
    %2042 = vst [vmem:[#allocation2 + $0x70] sm:$0xff] 0.0
    %2043 = vst [vmem:[#allocation2 + $0x80] sm:$0xff] 0.0
    %2044 = vst [vmem:[#allocation2 + $0x90] sm:$0xff] 0.0
    %2045 = vst [vmem:[#allocation2 + $0xa0] sm:$0xff] 0.0
    %2046 = vst [vmem:[#allocation2 + $0xb0] sm:$0xff] 0.0
    %2047 = vst [vmem:[#allocation2 + $0xc0] sm:$0xff] 0.0
    %2048 = vst [vmem:[#allocation2 + $0xd0] sm:$0xff] 0.0
    %2049 = vst [vmem:[#allocation2 + $0xe0] sm:$0xff] 0.0
    %2050 = vst [vmem:[#allocation2 + $0xf0] sm:$0xff] 0.0
    %2051 = vst [vmem:[#allocation2 + $0x100] sm:$0xff] 0.0
    %2052 = vst [vmem:[#allocation2 + $0x110] sm:$0xff] 0.0
    %2053 = vst [vmem:[#allocation2 + $0x120] sm:$0xff] 0.0
    %2054 = vst [vmem:[#allocation2 + $0x130] sm:$0xff] 0.0
    %s2055 = scalar_lea.vmem [#allocation2], 16
    %2056 = vst [vmem:[%s2055 + $0x8] sm:$0xff] %v2010
    %2057 = vst [vmem:[%s2055 + $0x18] sm:$0xff] %v2011
    %2058 = vst [vmem:[%s2055 + $0x28] sm:$0xff] %v2012
    %2059 = vst [vmem:[%s2055 + $0x38] sm:$0xff] %v2013
    %2060 = vst [vmem:[%s2055 + $0x48] sm:$0xff] %v2014
    %2061 = vst [vmem:[%s2055 + $0x58] sm:$0xff] %v2015
    %2062 = vst [vmem:[%s2055 + $0x68] sm:$0xff] %v2016
    %2063 = vst [vmem:[%s2055 + $0x78] sm:$0xff] %v2017
    %2064 = vst [vmem:[%s2055 + $0xa8] sm:$0xff] %v2018
    %2065 = vst [vmem:[%s2055 + $0xb8] sm:$0xff] %v2019
    %2066 = vst [vmem:[%s2055 + $0xc8] sm:$0xff] %v2020
    %2067 = vst [vmem:[%s2055 + $0xd8] sm:$0xff] %v2021
    %2068 = vst [vmem:[%s2055 + $0xe8] sm:$0xff] %v2022
    %2069 = vst [vmem:[%s2055 + $0xf8] sm:$0xff] %v2023
    %2070 = vst [vmem:[%s2055 + $0x108] sm:$0xff] %v2024
    %2071 = vst [vmem:[%s2055 + $0x118] sm:$0xff] %v2025
    %s2072 = scalar_lea.vmem [#allocation2], 7
    %v2073 = vld [vmem:[%s2072] ss:$2 sm:$0xf]
    %s2074 = scalar_lea.vmem [#allocation2], 23
    %v2075 = vld [vmem:[%s2074] ss:$2 sm:$0xf]
    %s2076 = scalar_lea.vmem [#allocation2], 39
    %v2077 = vld [vmem:[%s2076] ss:$2 sm:$0xf]
    %s2078 = scalar_lea.vmem [#allocation2], 55
    %v2079 = vld [vmem:[%s2078] ss:$2 sm:$0xf]
    %s2080 = scalar_lea.vmem [#allocation2], 71
    %v2081 = vld [vmem:[%s2080] ss:$2 sm:$0xf]
    %s2082 = scalar_lea.vmem [#allocation2], 87
    %v2083 = vld [vmem:[%s2082] ss:$2 sm:$0xf]
    %s2084 = scalar_lea.vmem [#allocation2], 103
    %v2085 = vld [vmem:[%s2084] ss:$2 sm:$0xf]
    %s2086 = scalar_lea.vmem [#allocation2], 119
    %v2087 = vld [vmem:[%s2086] ss:$2 sm:$0xf]
    %s2088 = scalar_lea.vmem [#allocation2], 135
    %v2089 = vld [vmem:[%s2088] ss:$2 sm:$0xf]
    %s2090 = scalar_lea.vmem [#allocation2], 167
    %v2091 = vld [vmem:[%s2090] ss:$2 sm:$0xf]
    %s2092 = scalar_lea.vmem [#allocation2], 183
    %v2093 = vld [vmem:[%s2092] ss:$2 sm:$0xf]
    %s2094 = scalar_lea.vmem [#allocation2], 199
    %v2095 = vld [vmem:[%s2094] ss:$2 sm:$0xf]
    %s2096 = scalar_lea.vmem [#allocation2], 215
    %v2097 = vld [vmem:[%s2096] ss:$2 sm:$0xf]
    %s2098 = scalar_lea.vmem [#allocation2], 231
    %v2099 = vld [vmem:[%s2098] ss:$2 sm:$0xf]
    %s2100 = scalar_lea.vmem [#allocation2], 247
    %v2101 = vld [vmem:[%s2100] ss:$2 sm:$0xf]
    %s2102 = scalar_lea.vmem [#allocation2], 263
    %v2103 = vld [vmem:[%s2102] ss:$2 sm:$0xf]
    %s2104 = scalar_lea.vmem [#allocation2], 279
    %v2105 = vld [vmem:[%s2104] ss:$2 sm:$0xf]
    %s2106 = scalar_lea.vmem [#allocation2], 295
    %v2107 = vld [vmem:[%s2106] ss:$2 sm:$0xf]
    %s2108 = scalar_lea.vmem [#allocation2], 8
    %v2109 = vld [vmem:[%s2108] ss:$2 sm:$0xf]
    %s2110 = scalar_lea.vmem [#allocation2], 24
    %v2111 = vld [vmem:[%s2110] ss:$2 sm:$0xf]
    %s2112 = scalar_lea.vmem [#allocation2], 40
    %v2113 = vld [vmem:[%s2112] ss:$2 sm:$0xf]
    %s2114 = scalar_lea.vmem [#allocation2], 56
    %v2115 = vld [vmem:[%s2114] ss:$2 sm:$0xf]
    %s2116 = scalar_lea.vmem [#allocation2], 72
    %v2117 = vld [vmem:[%s2116] ss:$2 sm:$0xf]
    %s2118 = scalar_lea.vmem [#allocation2], 88
    %v2119 = vld [vmem:[%s2118] ss:$2 sm:$0xf]
    %s2120 = scalar_lea.vmem [#allocation2], 104
    %v2121 = vld [vmem:[%s2120] ss:$2 sm:$0xf]
    %s2122 = scalar_lea.vmem [#allocation2], 120
    %v2123 = vld [vmem:[%s2122] ss:$2 sm:$0xf]
    %s2124 = scalar_lea.vmem [#allocation2], 136
    %v2125 = vld [vmem:[%s2124] ss:$2 sm:$0xf]
    %s2126 = scalar_lea.vmem [#allocation2], 168
    %v2127 = vld [vmem:[%s2126] ss:$2 sm:$0xf]
    %s2128 = scalar_lea.vmem [#allocation2], 184
    %v2129 = vld [vmem:[%s2128] ss:$2 sm:$0xf]
    %s2130 = scalar_lea.vmem [#allocation2], 200
    %v2131 = vld [vmem:[%s2130] ss:$2 sm:$0xf]
    %s2132 = scalar_lea.vmem [#allocation2], 216
    %v2133 = vld [vmem:[%s2132] ss:$2 sm:$0xf]
    %s2134 = scalar_lea.vmem [#allocation2], 232
    %v2135 = vld [vmem:[%s2134] ss:$2 sm:$0xf]
    %s2136 = scalar_lea.vmem [#allocation2], 248
    %v2137 = vld [vmem:[%s2136] ss:$2 sm:$0xf]
    %s2138 = scalar_lea.vmem [#allocation2], 264
    %v2139 = vld [vmem:[%s2138] ss:$2 sm:$0xf]
    %s2140 = scalar_lea.vmem [#allocation2], 280
    %v2141 = vld [vmem:[%s2140] ss:$2 sm:$0xf]
    %s2142 = scalar_lea.vmem [#allocation2], 296
    %v2143 = vld [vmem:[%s2142] ss:$2 sm:$0xf]
    %s2144 = scalar_lea.vmem [#allocation2], 9
    %v2145 = vld [vmem:[%s2144] ss:$2 sm:$0xf]
    %s2146 = scalar_lea.vmem [#allocation2], 25
    %v2147 = vld [vmem:[%s2146] ss:$2 sm:$0xf]
    %s2148 = scalar_lea.vmem [#allocation2], 41
    %v2149 = vld [vmem:[%s2148] ss:$2 sm:$0xf]
    %s2150 = scalar_lea.vmem [#allocation2], 57
    %v2151 = vld [vmem:[%s2150] ss:$2 sm:$0xf]
    %s2152 = scalar_lea.vmem [#allocation2], 73
    %v2153 = vld [vmem:[%s2152] ss:$2 sm:$0xf]
    %s2154 = scalar_lea.vmem [#allocation2], 89
    %v2155 = vld [vmem:[%s2154] ss:$2 sm:$0xf]
    %s2156 = scalar_lea.vmem [#allocation2], 105
    %v2157 = vld [vmem:[%s2156] ss:$2 sm:$0xf]
    %s2158 = scalar_lea.vmem [#allocation2], 121
    %v2159 = vld [vmem:[%s2158] ss:$2 sm:$0xf]
    %s2160 = scalar_lea.vmem [#allocation2], 137
    %v2161 = vld [vmem:[%s2160] ss:$2 sm:$0xf]
    %s2162 = scalar_lea.vmem [#allocation2], 169
    %v2163 = vld [vmem:[%s2162] ss:$2 sm:$0xf]
    %s2164 = scalar_lea.vmem [#allocation2], 185
    %v2165 = vld [vmem:[%s2164] ss:$2 sm:$0xf]
    %s2166 = scalar_lea.vmem [#allocation2], 201
    %v2167 = vld [vmem:[%s2166] ss:$2 sm:$0xf]
    %s2168 = scalar_lea.vmem [#allocation2], 217
    %v2169 = vld [vmem:[%s2168] ss:$2 sm:$0xf]
    %s2170 = scalar_lea.vmem [#allocation2], 233
    %v2171 = vld [vmem:[%s2170] ss:$2 sm:$0xf]
    %s2172 = scalar_lea.vmem [#allocation2], 249
    %v2173 = vld [vmem:[%s2172] ss:$2 sm:$0xf]
    %s2174 = scalar_lea.vmem [#allocation2], 265
    %v2175 = vld [vmem:[%s2174] ss:$2 sm:$0xf]
    %s2176 = scalar_lea.vmem [#allocation2], 281
    %v2177 = vld [vmem:[%s2176] ss:$2 sm:$0xf]
    %s2178 = scalar_lea.vmem [#allocation2], 297
    %v2179 = vld [vmem:[%s2178] ss:$2 sm:$0xf]
    %v2180 = vmax.f32 %v2073, %v2109
    %v2181 = vmax.f32 %v2075, %v2111
    %v2182 = vmax.f32 %v2077, %v2113
    %v2183 = vmax.f32 %v2079, %v2115
    %v2184 = vmax.f32 %v2081, %v2117
    %v2185 = vmax.f32 %v2083, %v2119
    %v2186 = vmax.f32 %v2085, %v2121
    %v2187 = vmax.f32 %v2087, %v2123
    %v2188 = vmax.f32 %v2089, %v2125
    %v2189 = vmax.f32 %v2091, %v2127
    %v2190 = vmax.f32 %v2093, %v2129
    %v2191 = vmax.f32 %v2095, %v2131
    %v2192 = vmax.f32 %v2097, %v2133
    %v2193 = vmax.f32 %v2099, %v2135
    %v2194 = vmax.f32 %v2101, %v2137
    %v2195 = vmax.f32 %v2103, %v2139
    %v2196 = vmax.f32 %v2105, %v2141
    %v2197 = vmax.f32 %v2107, %v2143
    %v2198 = vmax.f32 %v2180, %v2145
    %v2199 = vmax.f32 %v2181, %v2147
    %v2200 = vmax.f32 %v2182, %v2149
    %v2201 = vmax.f32 %v2183, %v2151
    %v2202 = vmax.f32 %v2184, %v2153
    %v2203 = vmax.f32 %v2185, %v2155
    %v2204 = vmax.f32 %v2186, %v2157
    %v2205 = vmax.f32 %v2187, %v2159
    %v2206 = vmax.f32 %v2188, %v2161
    %v2207 = vmax.f32 %v2189, %v2163
    %v2208 = vmax.f32 %v2190, %v2165
    %v2209 = vmax.f32 %v2191, %v2167
    %v2210 = vmax.f32 %v2192, %v2169
    %v2211 = vmax.f32 %v2193, %v2171
    %v2212 = vmax.f32 %v2194, %v2173
    %v2213 = vmax.f32 %v2195, %v2175
    %v2214 = vmax.f32 %v2196, %v2177
    %v2215 = vmax.f32 %v2197, %v2179
    %v2216 = vmax.f32 %v2198, %v2199
    %v2217 = vmax.f32 %v2200, %v2201
    %v2218 = vmax.f32 %v2202, %v2203
    %v2219 = vmax.f32 %v2204, %v2205
    %v2220 = vmax.f32 %v2207, %v2208
    %v2221 = vmax.f32 %v2209, %v2210
    %v2222 = vmax.f32 %v2211, %v2212
    %v2223 = vmax.f32 %v2213, %v2214
    %v2224 = vmax.f32 %v2216, %v2200
    %v2225 = vmax.f32 %v2217, %v2202
    %v2226 = vmax.f32 %v2218, %v2204
    %v2227 = vmax.f32 %v2219, %v2206
    %v2228 = vmax.f32 %v2220, %v2209
    %v2229 = vmax.f32 %v2221, %v2211
    %v2230 = vmax.f32 %v2222, %v2213
    %v2231 = vmax.f32 %v2223, %v2215
    %2232 = vst [vmem:[#allocation3] sm:$0xf] %v2224
    %2233 = vst [vmem:[#allocation3 + $0x4] sm:$0xf] %v2225
    %2234 = vst [vmem:[#allocation3 + $0x8] sm:$0xf] %v2226
    %2235 = vst [vmem:[#allocation3 + $0xc] sm:$0xf] %v2227
    %2236 = vst [vmem:[#allocation3 + $0x10] sm:$0xf] %v2228
    %2237 = vst [vmem:[#allocation3 + $0x14] sm:$0xf] %v2229
    %2238 = vst [vmem:[#allocation3 + $0x18] sm:$0xf] %v2230
    %2239 = vst [vmem:[#allocation3 + $0x1c] sm:$0xf] %v2231
    // Predicated region
    $region14: #{tpu_custom_call.1} parent=1 // pred_check
      _
    $region15: #{tpu_custom_call.1} parent=1 // pred_check_branch
      %2241 = sbr.rel (0) target = $region17
    $region16: #{tpu_custom_call.1} parent=1 // pred_region
      %s2243 = ssub.s32 512, 512
      %2244 = vsyncadd [#allocation4], %s2243
      %s2245 = sshll.u32 [#allocation3], 4
      %s2246 = int_to_ptr.vmem [resolvable:$true] %s2245
      %2251 = dma.vmem_to_hbm [thread:$0]  %s2246, 512, %s3, [#allocation4], 64, 64, 4
    $region17: #{tpu_custom_call.1} parent=1 // pred_fallthru
      _
    // Predicated region
    $region18: #{tpu_custom_call.1} parent=1 // pred_check
      _
    $region19: #{tpu_custom_call.1} parent=1 // pred_check_branch
      %2253 = sbr.rel (0) target = $region21
    $region20: #{tpu_custom_call.1} parent=1 // pred_region
      %2254 = dma.done [#allocation4], 512
    $region21: #{tpu_custom_call.1} parent=1 // pred_fallthru
      _
    %2255 = vsyncpa [#allocation4], 1

</llo_original>
